<compile_context>
chip_gen: v6e
topology: v6e:2x2x1
jax: 0.10.0
libtpu: 0.0.40
codegen_flags: <defaults>
</compile_context>

<pallas_src>
import jax
import jax.numpy as jnp
import numpy as np
from jax import lax
from jax.experimental import pallas as pl
from jax.experimental.pallas import tpu as pltpu


def rgcn_kernel(xflat_ref, A_ref, w_ih_ref, w_h_ref, bias_ref,
                hseq_ref, xp_ref):
    """Whole-sequence recurrent graph-conv LSTM cell in one invocation.

    xflat_ref : (seq*bs, F)   time-major flattened input sequence
    A_ref     : (bs, bs)      adjacency matrix
    w_ih_ref  : (F, 5H)       [W_ih | 0]      (input -> gates, zero q block)
    w_h_ref   : (H, 5H)       [W_hh | W_q]    (hidden -> gates + graph pre-act)
    bias_ref  : (1, 5H)       [bias, b_q]
    hseq_ref  : (seq, bs, H)  output hidden sequence (time-major)
    xp_ref    : (seq*bs, 5H)  VMEM scratch: precomputed input projection
    """
    seq, bs, H = hseq_ref.shape

    # Hoist time-invariant operands out of the loop (JAX will not CSE these).
    A_mat = A_ref[...]                               # (bs, bs)
    W_h = w_h_ref[...]                               # (H, 5H)

    # Whole-sequence input projection + fused bias: one lane-dense MXU push.
    # q columns get only b_q (the W_ih block there is zero).
    xp_ref[...] = (jnp.dot(xflat_ref[...], w_ih_ref[...],
                           preferred_element_type=jnp.float32)
                   + bias_ref[...])

    def step(t, carry):
        h, c = carry                                  # (bs, H) each, f32
        row = pl.multiple_of(t * bs, bs)              # sublane-aligned start
        base = xp_ref[pl.ds(row, bs), :]              # (bs, 5H) precomputed

        # Recurrent fused MXU push: gates (4H) and graph-conv pre-act (H).
        z = jnp.dot(h, W_h, preferred_element_type=jnp.float32) + base

        # Full-width activations (dense vregs), then lane slices.
        sg = jax.nn.sigmoid(z[:, :4 * H])             # (bs, 4H)
        th = jnp.tanh(z)                              # (bs, 5H)
        i_t = sg[:, 0 * H:1 * H]
        f_t = sg[:, 1 * H:2 * H]
        o_t = sg[:, 3 * H:4 * H]
        g_t = th[:, 2 * H:3 * H]
        q_t = th[:, 4 * H:5 * H]                      # tanh(h @ W_q + b_q)

        aq = jnp.dot(A_mat, q_t, preferred_element_type=jnp.float32)

        # dropout / recur_dropout are identity at rate 0 (inference semantics).
        c_new = f_t * (c + aq) + i_t * g_t
        h_new = o_t * jnp.tanh(c_new)

        hseq_ref[t] = h_new.astype(hseq_ref.dtype)    # one (bs, H) store/step
        return (h_new, c_new)

    h0 = jnp.zeros((bs, H), jnp.float32)
    c0 = jnp.zeros((bs, H), jnp.float32)
    lax.fori_loop(0, seq, step, (h0, c0), unroll=True)  # seq is small here


def rgcn_forward(x, A, w_ih, w_hh, bias, w_q, b_q, w_d, b_d):
    """x: (batch, seq, input_dim). Returns (batch, seq, 1)."""
    bs, seq, F = x.shape
    H = w_hh.shape[0]

    # Time-major, flattened (seq*bs, F) so the in-kernel input projection is a
    # single 2-D matmul (no rank-3 dot_general in the kernel).
    x_flat = jnp.transpose(x, (1, 0, 2)).reshape(seq * bs, F).astype(jnp.float32)

    # Fused weights: x -> [gates | 0], h -> [gates | q]; bias = [bias, b_q].
    w_ih_pad = jnp.concatenate(
        [w_ih, jnp.zeros((F, H), w_ih.dtype)], axis=1)         # (F, 5H)
    w_h = jnp.concatenate([w_hh, w_q], axis=1)                 # (H, 5H)
    bias_fused = jnp.concatenate([bias, b_q]).reshape(1, 5 * H)

    hseq_tf = pl.pallas_call(
        rgcn_kernel,
        out_shape=jax.ShapeDtypeStruct((seq, bs, H), jnp.float32),
        grid_spec=pltpu.PrefetchScalarGridSpec(
            num_scalar_prefetch=0,
            grid=(1,),
            in_specs=[
                pl.BlockSpec((seq * bs, F), lambda i: (0, 0)),      # x (flat)
                pl.BlockSpec((bs, bs), lambda i: (0, 0)),           # A
                pl.BlockSpec((F, 5 * H), lambda i: (0, 0)),         # [W_ih|0]
                pl.BlockSpec((H, 5 * H), lambda i: (0, 0)),         # [W_hh|W_q]
                pl.BlockSpec((1, 5 * H), lambda i: (0, 0)),         # bias
            ],
            out_specs=pl.BlockSpec((seq, bs, H), lambda i: (0, 0, 0)),
            scratch_shapes=[pltpu.VMEM((seq * bs, 5 * H), jnp.float32)],
        ),
        compiler_params=pltpu.CompilerParams(
            dimension_semantics=("arbitrary",)),   # recurrence: sequential
    )(x_flat, A, w_ih_pad, w_h, bias_fused)

    # Dense head once over the whole hidden sequence (single lane-dense matmul
    # instead of seq tiny (H,1) matmuls + masked width-1 stores in the kernel).
    hseq = jnp.transpose(hseq_tf, (1, 0, 2))                  # (bs, seq, H)
    return hseq @ w_d + b_d                                   # (bs, seq, 1)


def rgcn_reference(x, A, w_ih, w_hh, bias, w_q, b_q, w_d, b_d):
    """Pure-JAX reference mirroring the PyTorch forward loop."""
    bs, seq, _ = x.shape
    H = w_hh.shape[0]
    h_t = jnp.zeros((bs, H), jnp.float32)
    c_t = jnp.zeros((bs, H), jnp.float32)
    outs = []
    for t in range(seq):
        x_t = x[:, t, :]
        gates = x_t @ w_ih + h_t @ w_hh + bias
        i_t = jax.nn.sigmoid(gates[:, :H])
        f_t = jax.nn.sigmoid(gates[:, H:2 * H])
        g_t = jnp.tanh(gates[:, 2 * H:3 * H])
        o_t = jax.nn.sigmoid(gates[:, 3 * H:])
        q_t = jnp.tanh(h_t @ w_q + b_q)
        c_t = f_t * (c_t + A @ q_t) + i_t * g_t
        h_t = o_t * jnp.tanh(c_t)
        outs.append(h_t[:, None, :])
    hidden_seq = jnp.concatenate(outs, axis=1)
    return hidden_seq @ w_d + b_d


def xavier_uniform(key, shape):
    fan_in, fan_out = shape[0], shape[1]
    limit = float(np.sqrt(6.0 / (fan_in + fan_out)))
    return jax.random.uniform(key, shape, jnp.float32, -limit, limit)


if __name__ == "__main__":
    # Small shapes consistent with the module: batch = #graph nodes = 8,
    # seq = 8, input_dim = 4, hidden_dim = 32.
    bs, seq, F, H = 8, 8, 4, 32

    key = jax.random.PRNGKey(0)
    keys = jax.random.split(key, 8)

    x = jax.random.normal(keys[0], (bs, seq, F), jnp.float32)

    # Deterministic synthetic adjacency matrix (row-normalized).
    A_raw = jax.random.uniform(keys[1], (bs, bs), jnp.float32)
    A = A_raw / jnp.sum(A_raw, axis=1, keepdims=True)

    # Parameters (xavier_uniform for >=2D, zeros for biases, matching init_weights).
    w_q = xavier_uniform(keys[2], (H, H))
    b_q = jnp.zeros((H,), jnp.float32)
    w_ih = xavier_uniform(keys[3], (F, 4 * H))
    w_hh = xavier_uniform(keys[4], (H, 4 * H))
    bias = jnp.zeros((4 * H,), jnp.float32)
    # dense = nn.Linear(H, 1): synthetic deterministic init.
    w_d = xavier_uniform(keys[5], (H, 1))
    b_d = jax.random.uniform(keys[6], (1,), jnp.float32, -0.1, 0.1)

    out = rgcn_forward(x, A, w_ih, w_hh, bias, w_q, b_q, w_d, b_d)
    out = jax.block_until_ready(out)

    ref = rgcn_reference(x, A, w_ih, w_hh, bias, w_q, b_q, w_d, b_d)
    np.testing.assert_allclose(np.asarray(out), np.asarray(ref),
                               rtol=1e-4, atol=1e-4)
    assert out.shape == (bs, seq, 1)

    print("KERNEL_OK")
</pallas_src>

<mosaic_0001>
module attributes {stable_mosaic.version = 11 : i64} {
  func.func @rgcn_kernel(%arg0: i32, %arg1: memref<64x4xf32, #tpu.memory_space<vmem>>, %arg2: memref<8x8xf32, #tpu.memory_space<vmem>>, %arg3: memref<4x160xf32, #tpu.memory_space<vmem>>, %arg4: memref<32x160xf32, #tpu.memory_space<vmem>>, %arg5: memref<1x160xf32, #tpu.memory_space<vmem>>, %arg6: memref<8x8x32xf32, #tpu.memory_space<vmem>>, %arg7: memref<64x160xf32, #tpu.memory_space<vmem>>) attributes {dimension_semantics = [#tpu.dimension_semantics<arbitrary>], iteration_bounds = array<i64: 1>, scalar_prefetch = 0 : i64, scratch_operands = 1 : i64, tpu.core_type = #tpu.core_type<tc>, window_params = [{pipeline_mode = #tpu.pipeline_mode<synchronous>, transform_indices = @transform_0, window_bounds = array<i64: 64, 4>}, {pipeline_mode = #tpu.pipeline_mode<synchronous>, transform_indices = @transform_1, window_bounds = array<i64: 8, 8>}, {pipeline_mode = #tpu.pipeline_mode<synchronous>, transform_indices = @transform_2, window_bounds = array<i64: 4, 160>}, {pipeline_mode = #tpu.pipeline_mode<synchronous>, transform_indices = @transform_3, window_bounds = array<i64: 32, 160>}, {pipeline_mode = #tpu.pipeline_mode<synchronous>, transform_indices = @transform_4, window_bounds = array<i64: 1, 160>}, {pipeline_mode = #tpu.pipeline_mode<synchronous>, transform_indices = @transform_5, window_bounds = array<i64: 8, 8, 32>}]} {
    %c0 = arith.constant 0 : index
    %c0_0 = arith.constant 0 : index
    %0 = vector.load %arg2[%c0, %c0_0] : memref<8x8xf32, #tpu.memory_space<vmem>>, vector<8x8xf32>
    %c0_1 = arith.constant 0 : index
    %c0_2 = arith.constant 0 : index
    %1 = vector.load %arg4[%c0_1, %c0_2] : memref<32x160xf32, #tpu.memory_space<vmem>>, vector<32x160xf32>
    %c0_3 = arith.constant 0 : index
    %c0_4 = arith.constant 0 : index
    %2 = vector.load %arg1[%c0_3, %c0_4] : memref<64x4xf32, #tpu.memory_space<vmem>>, vector<64x4xf32>
    %c0_5 = arith.constant 0 : index
    %c0_6 = arith.constant 0 : index
    %3 = vector.load %arg3[%c0_5, %c0_6] : memref<4x160xf32, #tpu.memory_space<vmem>>, vector<4x160xf32>
    %cst = arith.constant dense<0.000000e+00> : vector<64x160xf32>
    %4 = tpu.matmul %2, %3, %cst {dimension_numbers = #tpu.dot_dimension_numbers<[1], [0], [0], [1], [0, 0, 1, 1], [], []>} : vector<64x4xf32>, vector<4x160xf32>, vector<64x160xf32> -> vector<64x160xf32>
    %c0_7 = arith.constant 0 : index
    %c0_8 = arith.constant 0 : index
    %5 = vector.load %arg5[%c0_7, %c0_8] : memref<1x160xf32, #tpu.memory_space<vmem>>, vector<1x160xf32>
    %6 = vector.broadcast %5 : vector<1x160xf32> to vector<64x160xf32>
    %7 = arith.addf %4, %6 : vector<64x160xf32>
    %c0_9 = arith.constant 0 : index
    %c0_10 = arith.constant 0 : index
    %8 = vector.load %arg7[%c0_9, %c0_10] : memref<64x160xf32, #tpu.memory_space<vmem>>, vector<64x160xf32>
    tpu.vector_store %arg7[%c0_9, %c0_10], %7 {strides = array<i32>} : memref<64x160xf32, #tpu.memory_space<vmem>>, vector<64x160xf32>,
    %cst_11 = arith.constant 0.000000e+00 : f32
    %9 = vector.broadcast %cst_11 : f32 to vector<8x32xf32>
    %cst_12 = arith.constant 0.000000e+00 : f32
    %10 = vector.broadcast %cst_12 : f32 to vector<8x32xf32>
    %c0_i32 = arith.constant 0 : i32
    %c8_i32 = arith.constant 8 : i32
    %11 = arith.muli %c0_i32, %c8_i32 : i32
    %12 = tpu.assume_multiple %11, 8 : i32
    %13 = arith.index_cast %12 : i32 to index
    %c0_13 = arith.constant 0 : index
    %14 = vector.load %arg7[%13, %c0_13] : memref<64x160xf32, #tpu.memory_space<vmem>>, vector<8x160xf32>
    %cst_14 = arith.constant dense<0.000000e+00> : vector<8x160xf32>
    %15 = tpu.matmul %9, %1, %cst_14 {dimension_numbers = #tpu.dot_dimension_numbers<[1], [0], [0], [1], [0, 0, 1, 1], [], []>} : vector<8x32xf32>, vector<32x160xf32>, vector<8x160xf32> -> vector<8x160xf32>
    %16 = arith.addf %15, %14 : vector<8x160xf32>
    %17 = vector.extract_strided_slice %16 {offsets = [0, 0], sizes = [8, 128], strides = [1, 1]} : vector<8x160xf32> to vector<8x128xf32>
    %18 = arith.negf %17 : vector<8x128xf32>
    %19 = math.exp %18 : vector<8x128xf32>
    %cst_15 = arith.constant 1.000000e+00 : f32
    %20 = vector.broadcast %cst_15 : f32 to vector<8x128xf32>
    %21 = arith.addf %20, %19 : vector<8x128xf32>
    %22 = arith.divf %20, %21 : vector<8x128xf32>
    %23 = math.tanh %16 : vector<8x160xf32>
    %24 = vector.extract_strided_slice %22 {offsets = [0, 0], sizes = [8, 32], strides = [1, 1]} : vector<8x128xf32> to vector<8x32xf32>
    %25 = vector.extract_strided_slice %22 {offsets = [0, 32], sizes = [8, 32], strides = [1, 1]} : vector<8x128xf32> to vector<8x32xf32>
    %26 = vector.extract_strided_slice %22 {offsets = [0, 96], sizes = [8, 32], strides = [1, 1]} : vector<8x128xf32> to vector<8x32xf32>
    %27 = vector.extract_strided_slice %23 {offsets = [0, 64], sizes = [8, 32], strides = [1, 1]} : vector<8x160xf32> to vector<8x32xf32>
    %28 = vector.extract_strided_slice %23 {offsets = [0, 128], sizes = [8, 32], strides = [1, 1]} : vector<8x160xf32> to vector<8x32xf32>
    %cst_16 = arith.constant dense<0.000000e+00> : vector<8x32xf32>
    %29 = tpu.matmul %0, %28, %cst_16 {dimension_numbers = #tpu.dot_dimension_numbers<[1], [0], [0], [1], [0, 0, 1, 1], [], []>} : vector<8x8xf32>, vector<8x32xf32>, vector<8x32xf32> -> vector<8x32xf32>
    %30 = arith.addf %10, %29 : vector<8x32xf32>
    %31 = arith.mulf %25, %30 : vector<8x32xf32>
    %32 = arith.mulf %24, %27 : vector<8x32xf32>
    %33 = arith.addf %31, %32 : vector<8x32xf32>
    %34 = math.tanh %33 : vector<8x32xf32>
    %35 = arith.mulf %26, %34 : vector<8x32xf32>
    %36 = arith.index_cast %c0_i32 : i32 to index
    %c0_17 = arith.constant 0 : index
    %c0_18 = arith.constant 0 : index
    %37 = vector.load %arg6[%36, %c0_17, %c0_18] : memref<8x8x32xf32, #tpu.memory_space<vmem>>, vector<1x8x32xf32>
    %38 = vector.shape_cast %37 : vector<1x8x32xf32> to vector<8x32xf32>
    %39 = vector.shape_cast %35 : vector<8x32xf32> to vector<1x8x32xf32>
    tpu.vector_store %arg6[%36, %c0_17, %c0_18], %39 {strides = array<i32>} : memref<8x8x32xf32, #tpu.memory_space<vmem>>, vector<1x8x32xf32>,
    %c1_i32 = arith.constant 1 : i32
    %c8_i32_19 = arith.constant 8 : i32
    %40 = arith.muli %c1_i32, %c8_i32_19 : i32
    %41 = tpu.assume_multiple %40, 8 : i32
    %42 = arith.index_cast %41 : i32 to index
    %c0_20 = arith.constant 0 : index
    %43 = vector.load %arg7[%42, %c0_20] : memref<64x160xf32, #tpu.memory_space<vmem>>, vector<8x160xf32>
    %cst_21 = arith.constant dense<0.000000e+00> : vector<8x160xf32>
    %44 = tpu.matmul %35, %1, %cst_21 {dimension_numbers = #tpu.dot_dimension_numbers<[1], [0], [0], [1], [0, 0, 1, 1], [], []>} : vector<8x32xf32>, vector<32x160xf32>, vector<8x160xf32> -> vector<8x160xf32>
    %45 = arith.addf %44, %43 : vector<8x160xf32>
    %46 = vector.extract_strided_slice %45 {offsets = [0, 0], sizes = [8, 128], strides = [1, 1]} : vector<8x160xf32> to vector<8x128xf32>
    %47 = arith.negf %46 : vector<8x128xf32>
    %48 = math.exp %47 : vector<8x128xf32>
    %cst_22 = arith.constant 1.000000e+00 : f32
    %49 = vector.broadcast %cst_22 : f32 to vector<8x128xf32>
    %50 = arith.addf %49, %48 : vector<8x128xf32>
    %51 = arith.divf %49, %50 : vector<8x128xf32>
    %52 = math.tanh %45 : vector<8x160xf32>
    %53 = vector.extract_strided_slice %51 {offsets = [0, 0], sizes = [8, 32], strides = [1, 1]} : vector<8x128xf32> to vector<8x32xf32>
    %54 = vector.extract_strided_slice %51 {offsets = [0, 32], sizes = [8, 32], strides = [1, 1]} : vector<8x128xf32> to vector<8x32xf32>
    %55 = vector.extract_strided_slice %51 {offsets = [0, 96], sizes = [8, 32], strides = [1, 1]} : vector<8x128xf32> to vector<8x32xf32>
    %56 = vector.extract_strided_slice %52 {offsets = [0, 64], sizes = [8, 32], strides = [1, 1]} : vector<8x160xf32> to vector<8x32xf32>
    %57 = vector.extract_strided_slice %52 {offsets = [0, 128], sizes = [8, 32], strides = [1, 1]} : vector<8x160xf32> to vector<8x32xf32>
    %cst_23 = arith.constant dense<0.000000e+00> : vector<8x32xf32>
    %58 = tpu.matmul %0, %57, %cst_23 {dimension_numbers = #tpu.dot_dimension_numbers<[1], [0], [0], [1], [0, 0, 1, 1], [], []>} : vector<8x8xf32>, vector<8x32xf32>, vector<8x32xf32> -> vector<8x32xf32>
    %59 = arith.addf %33, %58 : vector<8x32xf32>
    %60 = arith.mulf %54, %59 : vector<8x32xf32>
    %61 = arith.mulf %53, %56 : vector<8x32xf32>
    %62 = arith.addf %60, %61 : vector<8x32xf32>
    %63 = math.tanh %62 : vector<8x32xf32>
    %64 = arith.mulf %55, %63 : vector<8x32xf32>
    %65 = arith.index_cast %c1_i32 : i32 to index
    %c0_24 = arith.constant 0 : index
    %c0_25 = arith.constant 0 : index
    %66 = vector.load %arg6[%65, %c0_24, %c0_25] : memref<8x8x32xf32, #tpu.memory_space<vmem>>, vector<1x8x32xf32>
    %67 = vector.shape_cast %66 : vector<1x8x32xf32> to vector<8x32xf32>
    %68 = vector.shape_cast %64 : vector<8x32xf32> to vector<1x8x32xf32>
    tpu.vector_store %arg6[%65, %c0_24, %c0_25], %68 {strides = array<i32>} : memref<8x8x32xf32, #tpu.memory_space<vmem>>, vector<1x8x32xf32>,
    %c2_i32 = arith.constant 2 : i32
    %c8_i32_26 = arith.constant 8 : i32
    %69 = arith.muli %c2_i32, %c8_i32_26 : i32
    %70 = tpu.assume_multiple %69, 8 : i32
    %71 = arith.index_cast %70 : i32 to index
    %c0_27 = arith.constant 0 : index
    %72 = vector.load %arg7[%71, %c0_27] : memref<64x160xf32, #tpu.memory_space<vmem>>, vector<8x160xf32>
    %cst_28 = arith.constant dense<0.000000e+00> : vector<8x160xf32>
    %73 = tpu.matmul %64, %1, %cst_28 {dimension_numbers = #tpu.dot_dimension_numbers<[1], [0], [0], [1], [0, 0, 1, 1], [], []>} : vector<8x32xf32>, vector<32x160xf32>, vector<8x160xf32> -> vector<8x160xf32>
    %74 = arith.addf %73, %72 : vector<8x160xf32>
    %75 = vector.extract_strided_slice %74 {offsets = [0, 0], sizes = [8, 128], strides = [1, 1]} : vector<8x160xf32> to vector<8x128xf32>
    %76 = arith.negf %75 : vector<8x128xf32>
    %77 = math.exp %76 : vector<8x128xf32>
    %cst_29 = arith.constant 1.000000e+00 : f32
    %78 = vector.broadcast %cst_29 : f32 to vector<8x128xf32>
    %79 = arith.addf %78, %77 : vector<8x128xf32>
    %80 = arith.divf %78, %79 : vector<8x128xf32>
    %81 = math.tanh %74 : vector<8x160xf32>
    %82 = vector.extract_strided_slice %80 {offsets = [0, 0], sizes = [8, 32], strides = [1, 1]} : vector<8x128xf32> to vector<8x32xf32>
    %83 = vector.extract_strided_slice %80 {offsets = [0, 32], sizes = [8, 32], strides = [1, 1]} : vector<8x128xf32> to vector<8x32xf32>
    %84 = vector.extract_strided_slice %80 {offsets = [0, 96], sizes = [8, 32], strides = [1, 1]} : vector<8x128xf32> to vector<8x32xf32>
    %85 = vector.extract_strided_slice %81 {offsets = [0, 64], sizes = [8, 32], strides = [1, 1]} : vector<8x160xf32> to vector<8x32xf32>
    %86 = vector.extract_strided_slice %81 {offsets = [0, 128], sizes = [8, 32], strides = [1, 1]} : vector<8x160xf32> to vector<8x32xf32>
    %cst_30 = arith.constant dense<0.000000e+00> : vector<8x32xf32>
    %87 = tpu.matmul %0, %86, %cst_30 {dimension_numbers = #tpu.dot_dimension_numbers<[1], [0], [0], [1], [0, 0, 1, 1], [], []>} : vector<8x8xf32>, vector<8x32xf32>, vector<8x32xf32> -> vector<8x32xf32>
    %88 = arith.addf %62, %87 : vector<8x32xf32>
    %89 = arith.mulf %83, %88 : vector<8x32xf32>
    %90 = arith.mulf %82, %85 : vector<8x32xf32>
    %91 = arith.addf %89, %90 : vector<8x32xf32>
    %92 = math.tanh %91 : vector<8x32xf32>
    %93 = arith.mulf %84, %92 : vector<8x32xf32>
    %94 = arith.index_cast %c2_i32 : i32 to index
    %c0_31 = arith.constant 0 : index
    %c0_32 = arith.constant 0 : index
    %95 = vector.load %arg6[%94, %c0_31, %c0_32] : memref<8x8x32xf32, #tpu.memory_space<vmem>>, vector<1x8x32xf32>
    %96 = vector.shape_cast %95 : vector<1x8x32xf32> to vector<8x32xf32>
    %97 = vector.shape_cast %93 : vector<8x32xf32> to vector<1x8x32xf32>
    tpu.vector_store %arg6[%94, %c0_31, %c0_32], %97 {strides = array<i32>} : memref<8x8x32xf32, #tpu.memory_space<vmem>>, vector<1x8x32xf32>,
    %c3_i32 = arith.constant 3 : i32
    %c8_i32_33 = arith.constant 8 : i32
    %98 = arith.muli %c3_i32, %c8_i32_33 : i32
    %99 = tpu.assume_multiple %98, 8 : i32
    %100 = arith.index_cast %99 : i32 to index
    %c0_34 = arith.constant 0 : index
    %101 = vector.load %arg7[%100, %c0_34] : memref<64x160xf32, #tpu.memory_space<vmem>>, vector<8x160xf32>
    %cst_35 = arith.constant dense<0.000000e+00> : vector<8x160xf32>
    %102 = tpu.matmul %93, %1, %cst_35 {dimension_numbers = #tpu.dot_dimension_numbers<[1], [0], [0], [1], [0, 0, 1, 1], [], []>} : vector<8x32xf32>, vector<32x160xf32>, vector<8x160xf32> -> vector<8x160xf32>
    %103 = arith.addf %102, %101 : vector<8x160xf32>
    %104 = vector.extract_strided_slice %103 {offsets = [0, 0], sizes = [8, 128], strides = [1, 1]} : vector<8x160xf32> to vector<8x128xf32>
    %105 = arith.negf %104 : vector<8x128xf32>
    %106 = math.exp %105 : vector<8x128xf32>
    %cst_36 = arith.constant 1.000000e+00 : f32
    %107 = vector.broadcast %cst_36 : f32 to vector<8x128xf32>
    %108 = arith.addf %107, %106 : vector<8x128xf32>
    %109 = arith.divf %107, %108 : vector<8x128xf32>
    %110 = math.tanh %103 : vector<8x160xf32>
    %111 = vector.extract_strided_slice %109 {offsets = [0, 0], sizes = [8, 32], strides = [1, 1]} : vector<8x128xf32> to vector<8x32xf32>
    %112 = vector.extract_strided_slice %109 {offsets = [0, 32], sizes = [8, 32], strides = [1, 1]} : vector<8x128xf32> to vector<8x32xf32>
    %113 = vector.extract_strided_slice %109 {offsets = [0, 96], sizes = [8, 32], strides = [1, 1]} : vector<8x128xf32> to vector<8x32xf32>
    %114 = vector.extract_strided_slice %110 {offsets = [0, 64], sizes = [8, 32], strides = [1, 1]} : vector<8x160xf32> to vector<8x32xf32>
    %115 = vector.extract_strided_slice %110 {offsets = [0, 128], sizes = [8, 32], strides = [1, 1]} : vector<8x160xf32> to vector<8x32xf32>
    %cst_37 = arith.constant dense<0.000000e+00> : vector<8x32xf32>
    %116 = tpu.matmul %0, %115, %cst_37 {dimension_numbers = #tpu.dot_dimension_numbers<[1], [0], [0], [1], [0, 0, 1, 1], [], []>} : vector<8x8xf32>, vector<8x32xf32>, vector<8x32xf32> -> vector<8x32xf32>
    %117 = arith.addf %91, %116 : vector<8x32xf32>
    %118 = arith.mulf %112, %117 : vector<8x32xf32>
    %119 = arith.mulf %111, %114 : vector<8x32xf32>
    %120 = arith.addf %118, %119 : vector<8x32xf32>
    %121 = math.tanh %120 : vector<8x32xf32>
    %122 = arith.mulf %113, %121 : vector<8x32xf32>
    %123 = arith.index_cast %c3_i32 : i32 to index
    %c0_38 = arith.constant 0 : index
    %c0_39 = arith.constant 0 : index
    %124 = vector.load %arg6[%123, %c0_38, %c0_39] : memref<8x8x32xf32, #tpu.memory_space<vmem>>, vector<1x8x32xf32>
    %125 = vector.shape_cast %124 : vector<1x8x32xf32> to vector<8x32xf32>
    %126 = vector.shape_cast %122 : vector<8x32xf32> to vector<1x8x32xf32>
    tpu.vector_store %arg6[%123, %c0_38, %c0_39], %126 {strides = array<i32>} : memref<8x8x32xf32, #tpu.memory_space<vmem>>, vector<1x8x32xf32>,
    %c4_i32 = arith.constant 4 : i32
    %c8_i32_40 = arith.constant 8 : i32
    %127 = arith.muli %c4_i32, %c8_i32_40 : i32
    %128 = tpu.assume_multiple %127, 8 : i32
    %129 = arith.index_cast %128 : i32 to index
    %c0_41 = arith.constant 0 : index
    %130 = vector.load %arg7[%129, %c0_41] : memref<64x160xf32, #tpu.memory_space<vmem>>, vector<8x160xf32>
    %cst_42 = arith.constant dense<0.000000e+00> : vector<8x160xf32>
    %131 = tpu.matmul %122, %1, %cst_42 {dimension_numbers = #tpu.dot_dimension_numbers<[1], [0], [0], [1], [0, 0, 1, 1], [], []>} : vector<8x32xf32>, vector<32x160xf32>, vector<8x160xf32> -> vector<8x160xf32>
    %132 = arith.addf %131, %130 : vector<8x160xf32>
    %133 = vector.extract_strided_slice %132 {offsets = [0, 0], sizes = [8, 128], strides = [1, 1]} : vector<8x160xf32> to vector<8x128xf32>
    %134 = arith.negf %133 : vector<8x128xf32>
    %135 = math.exp %134 : vector<8x128xf32>
    %cst_43 = arith.constant 1.000000e+00 : f32
    %136 = vector.broadcast %cst_43 : f32 to vector<8x128xf32>
    %137 = arith.addf %136, %135 : vector<8x128xf32>
    %138 = arith.divf %136, %137 : vector<8x128xf32>
    %139 = math.tanh %132 : vector<8x160xf32>
    %140 = vector.extract_strided_slice %138 {offsets = [0, 0], sizes = [8, 32], strides = [1, 1]} : vector<8x128xf32> to vector<8x32xf32>
    %141 = vector.extract_strided_slice %138 {offsets = [0, 32], sizes = [8, 32], strides = [1, 1]} : vector<8x128xf32> to vector<8x32xf32>
    %142 = vector.extract_strided_slice %138 {offsets = [0, 96], sizes = [8, 32], strides = [1, 1]} : vector<8x128xf32> to vector<8x32xf32>
    %143 = vector.extract_strided_slice %139 {offsets = [0, 64], sizes = [8, 32], strides = [1, 1]} : vector<8x160xf32> to vector<8x32xf32>
    %144 = vector.extract_strided_slice %139 {offsets = [0, 128], sizes = [8, 32], strides = [1, 1]} : vector<8x160xf32> to vector<8x32xf32>
    %cst_44 = arith.constant dense<0.000000e+00> : vector<8x32xf32>
    %145 = tpu.matmul %0, %144, %cst_44 {dimension_numbers = #tpu.dot_dimension_numbers<[1], [0], [0], [1], [0, 0, 1, 1], [], []>} : vector<8x8xf32>, vector<8x32xf32>, vector<8x32xf32> -> vector<8x32xf32>
    %146 = arith.addf %120, %145 : vector<8x32xf32>
    %147 = arith.mulf %141, %146 : vector<8x32xf32>
    %148 = arith.mulf %140, %143 : vector<8x32xf32>
    %149 = arith.addf %147, %148 : vector<8x32xf32>
    %150 = math.tanh %149 : vector<8x32xf32>
    %151 = arith.mulf %142, %150 : vector<8x32xf32>
    %152 = arith.index_cast %c4_i32 : i32 to index
    %c0_45 = arith.constant 0 : index
    %c0_46 = arith.constant 0 : index
    %153 = vector.load %arg6[%152, %c0_45, %c0_46] : memref<8x8x32xf32, #tpu.memory_space<vmem>>, vector<1x8x32xf32>
    %154 = vector.shape_cast %153 : vector<1x8x32xf32> to vector<8x32xf32>
    %155 = vector.shape_cast %151 : vector<8x32xf32> to vector<1x8x32xf32>
    tpu.vector_store %arg6[%152, %c0_45, %c0_46], %155 {strides = array<i32>} : memref<8x8x32xf32, #tpu.memory_space<vmem>>, vector<1x8x32xf32>,
    %c5_i32 = arith.constant 5 : i32
    %c8_i32_47 = arith.constant 8 : i32
    %156 = arith.muli %c5_i32, %c8_i32_47 : i32
    %157 = tpu.assume_multiple %156, 8 : i32
    %158 = arith.index_cast %157 : i32 to index
    %c0_48 = arith.constant 0 : index
    %159 = vector.load %arg7[%158, %c0_48] : memref<64x160xf32, #tpu.memory_space<vmem>>, vector<8x160xf32>
    %cst_49 = arith.constant dense<0.000000e+00> : vector<8x160xf32>
    %160 = tpu.matmul %151, %1, %cst_49 {dimension_numbers = #tpu.dot_dimension_numbers<[1], [0], [0], [1], [0, 0, 1, 1], [], []>} : vector<8x32xf32>, vector<32x160xf32>, vector<8x160xf32> -> vector<8x160xf32>
    %161 = arith.addf %160, %159 : vector<8x160xf32>
    %162 = vector.extract_strided_slice %161 {offsets = [0, 0], sizes = [8, 128], strides = [1, 1]} : vector<8x160xf32> to vector<8x128xf32>
    %163 = arith.negf %162 : vector<8x128xf32>
    %164 = math.exp %163 : vector<8x128xf32>
    %cst_50 = arith.constant 1.000000e+00 : f32
    %165 = vector.broadcast %cst_50 : f32 to vector<8x128xf32>
    %166 = arith.addf %165, %164 : vector<8x128xf32>
    %167 = arith.divf %165, %166 : vector<8x128xf32>
    %168 = math.tanh %161 : vector<8x160xf32>
    %169 = vector.extract_strided_slice %167 {offsets = [0, 0], sizes = [8, 32], strides = [1, 1]} : vector<8x128xf32> to vector<8x32xf32>
    %170 = vector.extract_strided_slice %167 {offsets = [0, 32], sizes = [8, 32], strides = [1, 1]} : vector<8x128xf32> to vector<8x32xf32>
    %171 = vector.extract_strided_slice %167 {offsets = [0, 96], sizes = [8, 32], strides = [1, 1]} : vector<8x128xf32> to vector<8x32xf32>
    %172 = vector.extract_strided_slice %168 {offsets = [0, 64], sizes = [8, 32], strides = [1, 1]} : vector<8x160xf32> to vector<8x32xf32>
    %173 = vector.extract_strided_slice %168 {offsets = [0, 128], sizes = [8, 32], strides = [1, 1]} : vector<8x160xf32> to vector<8x32xf32>
    %cst_51 = arith.constant dense<0.000000e+00> : vector<8x32xf32>
    %174 = tpu.matmul %0, %173, %cst_51 {dimension_numbers = #tpu.dot_dimension_numbers<[1], [0], [0], [1], [0, 0, 1, 1], [], []>} : vector<8x8xf32>, vector<8x32xf32>, vector<8x32xf32> -> vector<8x32xf32>
    %175 = arith.addf %149, %174 : vector<8x32xf32>
    %176 = arith.mulf %170, %175 : vector<8x32xf32>
    %177 = arith.mulf %169, %172 : vector<8x32xf32>
    %178 = arith.addf %176, %177 : vector<8x32xf32>
    %179 = math.tanh %178 : vector<8x32xf32>
    %180 = arith.mulf %171, %179 : vector<8x32xf32>
    %181 = arith.index_cast %c5_i32 : i32 to index
    %c0_52 = arith.constant 0 : index
    %c0_53 = arith.constant 0 : index
    %182 = vector.load %arg6[%181, %c0_52, %c0_53] : memref<8x8x32xf32, #tpu.memory_space<vmem>>, vector<1x8x32xf32>
    %183 = vector.shape_cast %182 : vector<1x8x32xf32> to vector<8x32xf32>
    %184 = vector.shape_cast %180 : vector<8x32xf32> to vector<1x8x32xf32>
    tpu.vector_store %arg6[%181, %c0_52, %c0_53], %184 {strides = array<i32>} : memref<8x8x32xf32, #tpu.memory_space<vmem>>, vector<1x8x32xf32>,
    %c6_i32 = arith.constant 6 : i32
    %c8_i32_54 = arith.constant 8 : i32
    %185 = arith.muli %c6_i32, %c8_i32_54 : i32
    %186 = tpu.assume_multiple %185, 8 : i32
    %187 = arith.index_cast %186 : i32 to index
    %c0_55 = arith.constant 0 : index
    %188 = vector.load %arg7[%187, %c0_55] : memref<64x160xf32, #tpu.memory_space<vmem>>, vector<8x160xf32>
    %cst_56 = arith.constant dense<0.000000e+00> : vector<8x160xf32>
    %189 = tpu.matmul %180, %1, %cst_56 {dimension_numbers = #tpu.dot_dimension_numbers<[1], [0], [0], [1], [0, 0, 1, 1], [], []>} : vector<8x32xf32>, vector<32x160xf32>, vector<8x160xf32> -> vector<8x160xf32>
    %190 = arith.addf %189, %188 : vector<8x160xf32>
    %191 = vector.extract_strided_slice %190 {offsets = [0, 0], sizes = [8, 128], strides = [1, 1]} : vector<8x160xf32> to vector<8x128xf32>
    %192 = arith.negf %191 : vector<8x128xf32>
    %193 = math.exp %192 : vector<8x128xf32>
    %cst_57 = arith.constant 1.000000e+00 : f32
    %194 = vector.broadcast %cst_57 : f32 to vector<8x128xf32>
    %195 = arith.addf %194, %193 : vector<8x128xf32>
    %196 = arith.divf %194, %195 : vector<8x128xf32>
    %197 = math.tanh %190 : vector<8x160xf32>
    %198 = vector.extract_strided_slice %196 {offsets = [0, 0], sizes = [8, 32], strides = [1, 1]} : vector<8x128xf32> to vector<8x32xf32>
    %199 = vector.extract_strided_slice %196 {offsets = [0, 32], sizes = [8, 32], strides = [1, 1]} : vector<8x128xf32> to vector<8x32xf32>
    %200 = vector.extract_strided_slice %196 {offsets = [0, 96], sizes = [8, 32], strides = [1, 1]} : vector<8x128xf32> to vector<8x32xf32>
    %201 = vector.extract_strided_slice %197 {offsets = [0, 64], sizes = [8, 32], strides = [1, 1]} : vector<8x160xf32> to vector<8x32xf32>
    %202 = vector.extract_strided_slice %197 {offsets = [0, 128], sizes = [8, 32], strides = [1, 1]} : vector<8x160xf32> to vector<8x32xf32>
    %cst_58 = arith.constant dense<0.000000e+00> : vector<8x32xf32>
    %203 = tpu.matmul %0, %202, %cst_58 {dimension_numbers = #tpu.dot_dimension_numbers<[1], [0], [0], [1], [0, 0, 1, 1], [], []>} : vector<8x8xf32>, vector<8x32xf32>, vector<8x32xf32> -> vector<8x32xf32>
    %204 = arith.addf %178, %203 : vector<8x32xf32>
    %205 = arith.mulf %199, %204 : vector<8x32xf32>
    %206 = arith.mulf %198, %201 : vector<8x32xf32>
    %207 = arith.addf %205, %206 : vector<8x32xf32>
    %208 = math.tanh %207 : vector<8x32xf32>
    %209 = arith.mulf %200, %208 : vector<8x32xf32>
    %210 = arith.index_cast %c6_i32 : i32 to index
    %c0_59 = arith.constant 0 : index
    %c0_60 = arith.constant 0 : index
    %211 = vector.load %arg6[%210, %c0_59, %c0_60] : memref<8x8x32xf32, #tpu.memory_space<vmem>>, vector<1x8x32xf32>
    %212 = vector.shape_cast %211 : vector<1x8x32xf32> to vector<8x32xf32>
    %213 = vector.shape_cast %209 : vector<8x32xf32> to vector<1x8x32xf32>
    tpu.vector_store %arg6[%210, %c0_59, %c0_60], %213 {strides = array<i32>} : memref<8x8x32xf32, #tpu.memory_space<vmem>>, vector<1x8x32xf32>,
    %c7_i32 = arith.constant 7 : i32
    %c8_i32_61 = arith.constant 8 : i32
    %214 = arith.muli %c7_i32, %c8_i32_61 : i32
    %215 = tpu.assume_multiple %214, 8 : i32
    %216 = arith.index_cast %215 : i32 to index
    %c0_62 = arith.constant 0 : index
    %217 = vector.load %arg7[%216, %c0_62] : memref<64x160xf32, #tpu.memory_space<vmem>>, vector<8x160xf32>
    %cst_63 = arith.constant dense<0.000000e+00> : vector<8x160xf32>
    %218 = tpu.matmul %209, %1, %cst_63 {dimension_numbers = #tpu.dot_dimension_numbers<[1], [0], [0], [1], [0, 0, 1, 1], [], []>} : vector<8x32xf32>, vector<32x160xf32>, vector<8x160xf32> -> vector<8x160xf32>
    %219 = arith.addf %218, %217 : vector<8x160xf32>
    %220 = vector.extract_strided_slice %219 {offsets = [0, 0], sizes = [8, 128], strides = [1, 1]} : vector<8x160xf32> to vector<8x128xf32>
    %221 = arith.negf %220 : vector<8x128xf32>
    %222 = math.exp %221 : vector<8x128xf32>
    %cst_64 = arith.constant 1.000000e+00 : f32
    %223 = vector.broadcast %cst_64 : f32 to vector<8x128xf32>
    %224 = arith.addf %223, %222 : vector<8x128xf32>
    %225 = arith.divf %223, %224 : vector<8x128xf32>
    %226 = math.tanh %219 : vector<8x160xf32>
    %227 = vector.extract_strided_slice %225 {offsets = [0, 0], sizes = [8, 32], strides = [1, 1]} : vector<8x128xf32> to vector<8x32xf32>
    %228 = vector.extract_strided_slice %225 {offsets = [0, 32], sizes = [8, 32], strides = [1, 1]} : vector<8x128xf32> to vector<8x32xf32>
    %229 = vector.extract_strided_slice %225 {offsets = [0, 96], sizes = [8, 32], strides = [1, 1]} : vector<8x128xf32> to vector<8x32xf32>
    %230 = vector.extract_strided_slice %226 {offsets = [0, 64], sizes = [8, 32], strides = [1, 1]} : vector<8x160xf32> to vector<8x32xf32>
    %231 = vector.extract_strided_slice %226 {offsets = [0, 128], sizes = [8, 32], strides = [1, 1]} : vector<8x160xf32> to vector<8x32xf32>
    %cst_65 = arith.constant dense<0.000000e+00> : vector<8x32xf32>
    %232 = tpu.matmul %0, %231, %cst_65 {dimension_numbers = #tpu.dot_dimension_numbers<[1], [0], [0], [1], [0, 0, 1, 1], [], []>} : vector<8x8xf32>, vector<8x32xf32>, vector<8x32xf32> -> vector<8x32xf32>
    %233 = arith.addf %207, %232 : vector<8x32xf32>
    %234 = arith.mulf %228, %233 : vector<8x32xf32>
    %235 = arith.mulf %227, %230 : vector<8x32xf32>
    %236 = arith.addf %234, %235 : vector<8x32xf32>
    %237 = math.tanh %236 : vector<8x32xf32>
    %238 = arith.mulf %229, %237 : vector<8x32xf32>
    %239 = arith.index_cast %c7_i32 : i32 to index
    %c0_66 = arith.constant 0 : index
    %c0_67 = arith.constant 0 : index
    %240 = vector.load %arg6[%239, %c0_66, %c0_67] : memref<8x8x32xf32, #tpu.memory_space<vmem>>, vector<1x8x32xf32>
    %241 = vector.shape_cast %240 : vector<1x8x32xf32> to vector<8x32xf32>
    %242 = vector.shape_cast %238 : vector<8x32xf32> to vector<1x8x32xf32>
    tpu.vector_store %arg6[%239, %c0_66, %c0_67], %242 {strides = array<i32>} : memref<8x8x32xf32, #tpu.memory_space<vmem>>, vector<1x8x32xf32>,
    %c8_i32_68 = arith.constant 8 : i32
    return
  }
  func.func @transform_0(%arg0: i32) -> (i32, i32) {
    %c0_i32 = arith.constant 0 : i32
    %c0_i32_0 = arith.constant 0 : i32
    %c0_i32_1 = arith.constant 0 : i32
    return %c0_i32, %c0_i32_0 : i32, i32
  }
  func.func @transform_1(%arg0: i32) -> (i32, i32) {
    %c0_i32 = arith.constant 0 : i32
    %c0_i32_0 = arith.constant 0 : i32
    %c0_i32_1 = arith.constant 0 : i32
    return %c0_i32, %c0_i32_0 : i32, i32
  }
  func.func @transform_2(%arg0: i32) -> (i32, i32) {
    %c0_i32 = arith.constant 0 : i32
    %c0_i32_0 = arith.constant 0 : i32
    %c0_i32_1 = arith.constant 0 : i32
    return %c0_i32, %c0_i32_0 : i32, i32
  }
  func.func @transform_3(%arg0: i32) -> (i32, i32) {
    %c0_i32 = arith.constant 0 : i32
    %c0_i32_0 = arith.constant 0 : i32
    %c0_i32_1 = arith.constant 0 : i32
    return %c0_i32, %c0_i32_0 : i32, i32
  }
  func.func @transform_4(%arg0: i32) -> (i32, i32) {
    %c0_i32 = arith.constant 0 : i32
    %c0_i32_0 = arith.constant 0 : i32
    %c0_i32_1 = arith.constant 0 : i32
    return %c0_i32, %c0_i32_0 : i32, i32
  }
  func.func @transform_5(%arg0: i32) -> (i32, i32, i32) {
    %c0_i32 = arith.constant 0 : i32
    %c0_i32_0 = arith.constant 0 : i32
    %c0_i32_1 = arith.constant 0 : i32
    %c0_i32_2 = arith.constant 0 : i32
    return %c0_i32, %c0_i32_0, %c0_i32_1 : i32, i32, i32
  }
}

</mosaic_0001>

<llo_original>
// kernel: tpu_custom_call.1
$region0: #{tpu_custom_call.1}
  #allocation0 [shape = 'u32[]', space=smem, size = 0x4, offset = 0x4, fixed_abs, tag = 'smem constant byte address 0x4 - core index']
  #allocation1 [shape = 'u32[144,128]{1,0:T(1,128)}', space=vmem, size = 0x12000, scoped, tag = 'internal scratch']
  #allocation2 [shape = 'f32[64,160]{1,0:T(8,128)}', space=vmem, size = 0x10000, scoped, tag = 'scratch operand']
  %s0 = inlined_call_operand.vmem [shape: f32[64,4], index: 0, kind: input, shape index: {}]
  %s1 = inlined_call_operand.vmem [shape: f32[8,8], index: 1, kind: input, shape index: {}]
  %s2 = inlined_call_operand.hbm [shape: f32[4,160], index: 2, kind: input, shape index: {}]
  %s3 = inlined_call_operand.vmem [shape: f32[32,160], index: 3, kind: input, shape index: {}]
  %s4 = inlined_call_operand.vmem [shape: f32[1,160], index: 4, kind: input, shape index: {}]
  %s5 = inlined_call_operand.hbm [shape: f32[8,8,32], index: 5, kind: output, shape index: {}]
  %s6 = sld [smem:[#allocation0]]
  $region34: #{tpu_custom_call.1} parent=0
    _
  %s8 = ssub.s32 1, %s6
  %s9 = scalar_select 0, %s8, %s6
  $region1: #{tpu_custom_call.1} parent=0
    #allocation3 [shape = 'u8[4096]{0}', space=vmem, size = 0x1000, scoped, tag = 'input window, operand 2, single buffered']
    #allocation4 [shape = 's32[1]{0}', space=sflag, size = 0x4, scoped, tag = 'scoped memory for tpu_custom_call.1']
    #allocation5 [shape = 's32[1]{0}', space=sflag, size = 0x4, scoped, tag = 'scoped memory for tpu_custom_call.1']
    #allocation6 [shape = 'u8[32768]{0}', space=vmem, size = 0x8000, scoped, tag = 'output window, operand 0, single buffered']
    %10 = vsyncpa [#allocation4], 0
    %11 = vsyncpa [#allocation5], 0
    // Predicated region
    $region2: #{tpu_custom_call.1} parent=1 // pred_check
      _
    $region3: #{tpu_custom_call.1} parent=1 // pred_check_branch
      %13 = sbr.rel (0) target = $region5
    $region4: #{tpu_custom_call.1} parent=1 // pred_region
      _
    $region5: #{tpu_custom_call.1} parent=1 // pred_fallthru
      _
    // Predicated region
    $region6: #{tpu_custom_call.1} parent=1 // pred_check
      _
    $region7: #{tpu_custom_call.1} parent=1 // pred_check_branch
      %15 = sbr.rel (0) target = $region9
    $region8: #{tpu_custom_call.1} parent=1 // pred_region
      _
    $region9: #{tpu_custom_call.1} parent=1 // pred_fallthru
      _
    // Predicated region
    $region10: #{tpu_custom_call.1} parent=1 // pred_check
      _
    $region11: #{tpu_custom_call.1} parent=1 // pred_check_branch
      %17 = sbr.rel (0) target = $region13
    $region12: #{tpu_custom_call.1} parent=1 // pred_region
      %s19 = ssub.s32 128, 128
      %20 = vsyncadd [#allocation4], %s19
      %s22 = sshll.u32 [#allocation3], 4
      %s23 = int_to_ptr.vmem [resolvable:$true] %s22
      %25 = dma.hbm_to_vmem [thread:$0]  %s2, 128, %s23, [#allocation4]
    $region13: #{tpu_custom_call.1} parent=1 // pred_fallthru
      _
    // Predicated region
    $region14: #{tpu_custom_call.1} parent=1 // pred_check
      _
    $region15: #{tpu_custom_call.1} parent=1 // pred_check_branch
      %27 = sbr.rel (0) target = $region17
    $region16: #{tpu_custom_call.1} parent=1 // pred_region
      _
    $region17: #{tpu_custom_call.1} parent=1 // pred_fallthru
      _
    // Predicated region
    $region18: #{tpu_custom_call.1} parent=1 // pred_check
      _
    $region19: #{tpu_custom_call.1} parent=1 // pred_check_branch
      %29 = sbr.rel (0) target = $region21
    $region20: #{tpu_custom_call.1} parent=1 // pred_region
      _
    $region21: #{tpu_custom_call.1} parent=1 // pred_fallthru
      _
    // Predicated region
    $region22: #{tpu_custom_call.1} parent=1 // pred_check
      _
    $region23: #{tpu_custom_call.1} parent=1 // pred_check_branch
      %31 = sbr.rel (0) target = $region25
    $region24: #{tpu_custom_call.1} parent=1 // pred_region
      %32 = dma.done [#allocation4], 128
    $region25: #{tpu_custom_call.1} parent=1 // pred_fallthru
      _
    %v33 = vld [vmem:[%s1] sm:$0xff]
    %v34 = vld [vmem:[%s3] sm:$0xff]
    %v35 = vld [vmem:[%s3 + $0x8] sm:$0xff]
    %v36 = vld [vmem:[%s3 + $0x10] sm:$0xff]
    %v37 = vld [vmem:[%s3 + $0x18] sm:$0xff]
    %v38 = vld [vmem:[%s3 + $0x20] sm:$0xff]
    %v39 = vld [vmem:[%s3 + $0x28] sm:$0xff]
    %v40 = vld [vmem:[%s3 + $0x30] sm:$0xff]
    %v41 = vld [vmem:[%s3 + $0x38] sm:$0xff]
    %v42 = vld [vmem:[%s0] sm:$0xff]
    %v43 = vld [vmem:[%s0 + $0x8] sm:$0xff]
    %v44 = vld [vmem:[%s0 + $0x10] sm:$0xff]
    %v45 = vld [vmem:[%s0 + $0x18] sm:$0xff]
    %v46 = vld [vmem:[%s0 + $0x20] sm:$0xff]
    %v47 = vld [vmem:[%s0 + $0x28] sm:$0xff]
    %v48 = vld [vmem:[%s0 + $0x30] sm:$0xff]
    %v49 = vld [vmem:[%s0 + $0x38] sm:$0xff]
    %v50 = vld [vmem:[#allocation3] sm:$0xff]
    %v51 = vld [vmem:[%s4] sm:$0x3]
    %v53 = vlaneseq
    %v54 = vshrl.u32 %v53, 7
    %v55 = vsub.s32 0, %v54
    %v56 = vrot.slane %v51, %v55
    %v57 = vlaneseq
    %v58 = vshrl.u32 %v57, 7
    %v59 = vsub.s32 1, %v58
    %v60 = vrot.slane %v51, %v59
    %v64 = vcombine.high %v50, %v50
    %vm65 = vcmask 31744
    %v67 = vsel %vm65, %v42, 0
    %v70 = vsel %vm65, %v43, 0
    %v73 = vsel %vm65, %v44, 0
    %v76 = vsel %vm65, %v45, 0
    %v79 = vsel %vm65, %v46, 0
    %v82 = vsel %vm65, %v47, 0
    %v85 = vsel %vm65, %v48, 0
    %v88 = vsel %vm65, %v49, 0
    %vm90 = vcmask 1043456
    %v91 = vsel %vm90, %v50, 0
    %v93 = vsel %vm90, %v64, 0
    %95 = vmatprep.subr.mxu0 0.0
    %96 = vmatpush1.msra.mxu0 0.0
    %97 = vmatprep.subr.mxu0 0.0
    %98 = vmatpush1.msra.mxu0 0.0
    %99 = vmatprep.subr.mxu0 0.0
    %100 = vmatpush1.msra.mxu0 0.0
    %101 = vmatprep.subr.mxu0 0.0
    %102 = vmatpush1.msra.mxu0 0.0
    %103 = vmatprep.subr.mxu0 0.0
    %104 = vmatpush1.msra.mxu0 0.0
    %105 = vmatprep.subr.mxu0 0.0
    %106 = vmatpush1.msra.mxu0 0.0
    %107 = vmatprep.subr.mxu0 0.0
    %108 = vmatpush1.msra.mxu0 0.0
    %109 = vmatprep.subr.mxu0 0.0
    %110 = vmatpush1.msra.mxu0 0.0
    %111 = vmatprep.subr.mxu0 0.0
    %112 = vmatpush1.msra.mxu0 0.0
    %113 = vmatprep.subr.mxu0 0.0
    %114 = vmatpush1.msra.mxu0 0.0
    %115 = vmatprep.subr.mxu0 0.0
    %116 = vmatpush1.msra.mxu0 0.0
    %117 = vmatprep.subr.mxu0 0.0
    %118 = vmatpush1.msra.mxu0 0.0
    %119 = vmatprep.subr.mxu0 0.0
    %120 = vmatpush1.msra.mxu0 0.0
    %121 = vmatprep.subr.mxu0 0.0
    %122 = vmatpush1.msra.mxu0 0.0
    %123 = vmatprep.subr.mxu0 0.0
    %124 = vmatpush1.msra.mxu0 0.0
    %125 = vmatprep.subr.mxu0 %v93
    %126 = vmatpush1.msra.mxu0 %v91
    %127 = vmatprep.subr.mxu0 0.0
    %128 = vmatpush2.msra.mxu0 0.0
    %129 = vmatprep.subr.mxu0 0.0
    %130 = vmatpush2.msra.mxu0 0.0
    %131 = vmatprep.subr.mxu0 0.0
    %132 = vmatpush2.msra.mxu0 0.0
    %133 = vmatprep.subr.mxu0 0.0
    %134 = vmatpush2.msra.mxu0 0.0
    %135 = vmatprep.subr.mxu0 0.0
    %136 = vmatpush2.msra.mxu0 0.0
    %137 = vmatprep.subr.mxu0 0.0
    %138 = vmatpush2.msra.mxu0 0.0
    %139 = vmatprep.subr.mxu0 0.0
    %140 = vmatpush2.msra.mxu0 0.0
    %141 = vmatprep.subr.mxu0 0.0
    %142 = vmatpush2.msra.mxu0 0.0
    %143 = vmatprep.subr.mxu0 0.0
    %144 = vmatpush2.msra.mxu0 0.0
    %145 = vmatprep.subr.mxu0 0.0
    %146 = vmatpush2.msra.mxu0 0.0
    %147 = vmatprep.subr.mxu0 0.0
    %148 = vmatpush2.msra.mxu0 0.0
    %149 = vmatprep.subr.mxu0 0.0
    %150 = vmatpush2.msra.mxu0 0.0
    %151 = vmatprep.subr.mxu0 0.0
    %152 = vmatpush2.msra.mxu0 0.0
    %153 = vmatprep.subr.mxu0 0.0
    %154 = vmatpush2.msra.mxu0 0.0
    %155 = vmatprep.subr.mxu0 0.0
    %156 = vmatpush2.msra.mxu0 0.0
    %157 = vmatprep.subr.mxu0 0.0
    %158 = vmatpush2.msra.mxu0 0.0
    %159 = vmatprep.mubr.f32.mxu0 0.0
    %160 = vmatmul.mubr.f32.gmra.mxu0 %v67
    %v161 = vpop.f32.mrf.mxu0
    %v162 = vadd.f32 %v56, %v161
    %v163 = vpop.f32.mrf.mxu0
    %v164 = vadd.f32 %v60, %v163
    %165 = vmatprep.mubr.f32.mxu0 0.0
    %166 = vmatmul.mubr.f32.gmra.mxu0 %v70
    %v167 = vpop.f32.mrf.mxu0
    %v168 = vadd.f32 %v56, %v167
    %v169 = vpop.f32.mrf.mxu0
    %v170 = vadd.f32 %v60, %v169
    %171 = vmatprep.mubr.f32.mxu0 0.0
    %172 = vmatmul.mubr.f32.gmra.mxu0 %v73
    %v173 = vpop.f32.mrf.mxu0
    %v174 = vadd.f32 %v56, %v173
    %v175 = vpop.f32.mrf.mxu0
    %v176 = vadd.f32 %v60, %v175
    %177 = vmatprep.mubr.f32.mxu0 0.0
    %178 = vmatmul.mubr.f32.gmra.mxu0 %v76
    %v179 = vpop.f32.mrf.mxu0
    %v180 = vadd.f32 %v56, %v179
    %v181 = vpop.f32.mrf.mxu0
    %v182 = vadd.f32 %v60, %v181
    %183 = vmatprep.mubr.f32.mxu0 0.0
    %184 = vmatmul.mubr.f32.gmra.mxu0 %v79
    %v185 = vpop.f32.mrf.mxu0
    %v186 = vadd.f32 %v56, %v185
    %v187 = vpop.f32.mrf.mxu0
    %v188 = vadd.f32 %v60, %v187
    %189 = vmatprep.mubr.f32.mxu0 0.0
    %190 = vmatmul.mubr.f32.gmra.mxu0 %v82
    %v191 = vpop.f32.mrf.mxu0
    %v192 = vadd.f32 %v56, %v191
    %v193 = vpop.f32.mrf.mxu0
    %v194 = vadd.f32 %v60, %v193
    %195 = vmatprep.mubr.f32.mxu0 0.0
    %196 = vmatmul.mubr.f32.gmra.mxu0 %v85
    %v197 = vpop.f32.mrf.mxu0
    %v198 = vadd.f32 %v56, %v197
    %v199 = vpop.f32.mrf.mxu0
    %v200 = vadd.f32 %v60, %v199
    %201 = vmatprep.mubr.f32.mxu0 0.0
    %202 = vmatmul.mubr.f32.gmra.mxu0 %v88
    %v203 = vpop.f32.mrf.mxu0
    %v204 = vadd.f32 %v56, %v203
    %v205 = vpop.f32.mrf.mxu0
    %v206 = vadd.f32 %v60, %v205
    %207 = vdwg.mxu0
    %208 = vst [vmem:[#allocation2] sm:$0xff] %v162
    %vm209 = vcmask 261120
    %210 = vst.msk [vmem:[#allocation2 + $0x8] sm:$0xff] %vm209, %v164
    %211 = vst [vmem:[#allocation2 + $0x10] sm:$0xff] %v168
    %212 = vst.msk [vmem:[#allocation2 + $0x18] sm:$0xff] %vm209, %v170
    %213 = vst [vmem:[#allocation2 + $0x20] sm:$0xff] %v174
    %214 = vst.msk [vmem:[#allocation2 + $0x28] sm:$0xff] %vm209, %v176
    %215 = vst [vmem:[#allocation2 + $0x30] sm:$0xff] %v180
    %216 = vst.msk [vmem:[#allocation2 + $0x38] sm:$0xff] %vm209, %v182
    %217 = vst [vmem:[#allocation2 + $0x40] sm:$0xff] %v186
    %218 = vst.msk [vmem:[#allocation2 + $0x48] sm:$0xff] %vm209, %v188
    %219 = vst [vmem:[#allocation2 + $0x50] sm:$0xff] %v192
    %220 = vst.msk [vmem:[#allocation2 + $0x58] sm:$0xff] %vm209, %v194
    %221 = vst [vmem:[#allocation2 + $0x60] sm:$0xff] %v198
    %222 = vst.msk [vmem:[#allocation2 + $0x68] sm:$0xff] %vm209, %v200
    %223 = vst [vmem:[#allocation2 + $0x70] sm:$0xff] %v204
    %224 = vst.msk [vmem:[#allocation2 + $0x78] sm:$0xff] %vm209, %v206
    %s225 = smul.u32 0, 2
    %s226 = smul.addr %s225, 8
    %s227 = scalar_lea.vmem [#allocation2], %s226
    %v228 = vld [vmem:[%s227] sm:$0xff]
    %v229 = vld [vmem:[%s227 + $0x8] sm:$0xff]
    %v231 = vsel %vm209, 0.0, 0
    %233 = vmatprep.subr.mxu0 0.0
    %234 = vmatpush1.msra.mxu0 0.0
    %235 = vmatprep.subr.mxu0 0.0
    %236 = vmatpush1.msra.mxu0 0.0
    %237 = vmatprep.subr.mxu0 0.0
    %238 = vmatpush1.msra.mxu0 0.0
    %239 = vmatprep.subr.mxu0 0.0
    %240 = vmatpush1.msra.mxu0 0.0
    %241 = vmatprep.subr.mxu0 0.0
    %242 = vmatpush1.msra.mxu0 0.0
    %243 = vmatprep.subr.mxu0 0.0
    %244 = vmatpush1.msra.mxu0 0.0
    %245 = vmatprep.subr.mxu0 0.0
    %246 = vmatpush1.msra.mxu0 0.0
    %247 = vmatprep.subr.mxu0 0.0
    %248 = vmatpush1.msra.mxu0 0.0
    %249 = vmatprep.subr.mxu0 0.0
    %250 = vmatpush1.msra.mxu0 0.0
    %251 = vmatprep.subr.mxu0 0.0
    %252 = vmatpush1.msra.mxu0 0.0
    %253 = vmatprep.subr.mxu0 0.0
    %254 = vmatpush1.msra.mxu0 0.0
    %255 = vmatprep.subr.mxu0 0.0
    %256 = vmatpush1.msra.mxu0 0.0
    %257 = vmatprep.subr.mxu0 %v41
    %258 = vmatpush1.msra.mxu0 %v40
    %259 = vmatprep.subr.mxu0 %v39
    %260 = vmatpush1.msra.mxu0 %v38
    %261 = vmatprep.subr.mxu0 %v37
    %262 = vmatpush1.msra.mxu0 %v36
    %263 = vmatprep.subr.mxu0 %v35
    %264 = vmatpush1.msra.mxu0 %v34
    %265 = vmatprep.subr.mxu0 0.0
    %266 = vmatpush2.msra.mxu0 0.0
    %267 = vmatprep.subr.mxu0 0.0
    %268 = vmatpush2.msra.mxu0 0.0
    %269 = vmatprep.subr.mxu0 0.0
    %270 = vmatpush2.msra.mxu0 0.0
    %271 = vmatprep.subr.mxu0 0.0
    %272 = vmatpush2.msra.mxu0 0.0
    %273 = vmatprep.subr.mxu0 0.0
    %274 = vmatpush2.msra.mxu0 0.0
    %275 = vmatprep.subr.mxu0 0.0
    %276 = vmatpush2.msra.mxu0 0.0
    %277 = vmatprep.subr.mxu0 0.0
    %278 = vmatpush2.msra.mxu0 0.0
    %279 = vmatprep.subr.mxu0 0.0
    %280 = vmatpush2.msra.mxu0 0.0
    %281 = vmatprep.subr.mxu0 0.0
    %282 = vmatpush2.msra.mxu0 0.0
    %283 = vmatprep.subr.mxu0 0.0
    %284 = vmatpush2.msra.mxu0 0.0
    %285 = vmatprep.subr.mxu0 0.0
    %286 = vmatpush2.msra.mxu0 0.0
    %287 = vmatprep.subr.mxu0 0.0
    %288 = vmatpush2.msra.mxu0 0.0
    %289 = vmatprep.subr.mxu0 0.0
    %290 = vmatpush2.msra.mxu0 0.0
    %291 = vmatprep.subr.mxu0 0.0
    %292 = vmatpush2.msra.mxu0 0.0
    %293 = vmatprep.subr.mxu0 0.0
    %294 = vmatpush2.msra.mxu0 0.0
    %295 = vmatprep.subr.mxu0 0.0
    %296 = vmatpush2.msra.mxu0 0.0
    %297 = vmatprep.mubr.f32.mxu0 0.0
    %298 = vmatmul.mubr.f32.gmra.mxu0 %v231
    %v299 = vpop.f32.mrf.mxu0
    %v300 = vadd.f32 %v228, %v299
    %v301 = vpop.f32.mrf.mxu0
    %v302 = vadd.f32 %v229, %v301
    %303 = vdwg.mxu0
    %v304 = vxor.u32 %v300, 2147483648
    %v305 = vmul.f32 %v304, 1.442695
    %v306 = vpow.pop %v305
    %v307 = vadd.f32 %v306, 1.0
    %v308 = vrcp.pop %v307
    %v309 = vmul.f32 1.0, %v308
    %v310 = vtanh.pop %v300
    %v311 = vtanh.pop %v302
    %vm312 = vcmask 64512
    %v314 = vsel %vm312, %v33, 0
    %316 = vmatprep.subr.mxu0 0.0
    %317 = vmatpush1.msra.mxu0 0.0
    %318 = vmatprep.subr.mxu0 0.0
    %319 = vmatpush1.msra.mxu0 0.0
    %320 = vmatprep.subr.mxu0 0.0
    %321 = vmatpush1.msra.mxu0 0.0
    %322 = vmatprep.subr.mxu0 0.0
    %323 = vmatpush1.msra.mxu0 0.0
    %324 = vmatprep.subr.mxu0 0.0
    %325 = vmatpush1.msra.mxu0 0.0
    %326 = vmatprep.subr.mxu0 0.0
    %327 = vmatpush1.msra.mxu0 0.0
    %328 = vmatprep.subr.mxu0 0.0
    %329 = vmatpush1.msra.mxu0 0.0
    %330 = vmatprep.subr.mxu0 0.0
    %331 = vmatpush1.msra.mxu0 0.0
    %332 = vmatprep.subr.mxu0 0.0
    %333 = vmatpush1.msra.mxu0 0.0
    %334 = vmatprep.subr.mxu0 0.0
    %335 = vmatpush1.msra.mxu0 0.0
    %336 = vmatprep.subr.mxu0 0.0
    %337 = vmatpush1.msra.mxu0 0.0
    %338 = vmatprep.subr.mxu0 0.0
    %339 = vmatpush1.msra.mxu0 0.0
    %340 = vmatprep.subr.mxu0 0.0
    %341 = vmatpush1.msra.mxu0 0.0
    %342 = vmatprep.subr.mxu0 0.0
    %343 = vmatpush1.msra.mxu0 0.0
    %344 = vmatprep.subr.mxu0 0.0
    %345 = vmatpush1.msra.mxu0 0.0
    %346 = vmatprep.subr.mxu0 0.0
    %347 = vmatpush1.msra.mxu0 %v311
    %348 = vmatprep.subr.mxu0 0.0
    %349 = vmatpush2.msra.mxu0 0.0
    %350 = vmatprep.subr.mxu0 0.0
    %351 = vmatpush2.msra.mxu0 0.0
    %352 = vmatprep.subr.mxu0 0.0
    %353 = vmatpush2.msra.mxu0 0.0
    %354 = vmatprep.subr.mxu0 0.0
    %355 = vmatpush2.msra.mxu0 0.0
    %356 = vmatprep.subr.mxu0 0.0
    %357 = vmatpush2.msra.mxu0 0.0
    %358 = vmatprep.subr.mxu0 0.0
    %359 = vmatpush2.msra.mxu0 0.0
    %360 = vmatprep.subr.mxu0 0.0
    %361 = vmatpush2.msra.mxu0 0.0
    %362 = vmatprep.subr.mxu0 0.0
    %363 = vmatpush2.msra.mxu0 0.0
    %364 = vmatprep.subr.mxu0 0.0
    %365 = vmatpush2.msra.mxu0 0.0
    %366 = vmatprep.subr.mxu0 0.0
    %367 = vmatpush2.msra.mxu0 0.0
    %368 = vmatprep.subr.mxu0 0.0
    %369 = vmatpush2.msra.mxu0 0.0
    %370 = vmatprep.subr.mxu0 0.0
    %371 = vmatpush2.msra.mxu0 0.0
    %372 = vmatprep.subr.mxu0 0.0
    %373 = vmatpush2.msra.mxu0 0.0
    %374 = vmatprep.subr.mxu0 0.0
    %375 = vmatpush2.msra.mxu0 0.0
    %376 = vmatprep.subr.mxu0 0.0
    %377 = vmatpush2.msra.mxu0 0.0
    %378 = vmatprep.subr.mxu0 0.0
    %379 = vmatpush2.msra.mxu0 0.0
    %380 = vmatprep.mubr.f32.mxu0 0.0
    %381 = vmatmul.mubr.f32.gmra.mxu0 %v314
    %v382 = vpop.f32.mrf.mxu0
    %v383 = vadd.f32 0.0, %v382
    %v384 = vpop.f32.mrf.mxu0
    %385 = vdwg.mxu0
    %387 = vrot.lane.b32.xlu0 %v383, 32
    %v388 = vpop.permute.xlu0 %387
    %v390 = vmul.f32 %v309, %v388
    %392 = vrot.lane.b32.xlu0 %v310, 64
    %v393 = vpop.permute.xlu0 %392
    %v395 = vmul.f32 %v309, %v393
    %397 = vrot.lane.b32.xlu0 %v395, 32
    %v398 = vpop.permute.xlu0 %397
    %v400 = vadd.f32 %v390, %v398
    %v401 = vtanh.pop %v400
    %403 = vrot.lane.b32.xlu0 %v401, 64
    %v404 = vpop.permute.xlu0 %403
    %v406 = vmul.f32 %v309, %v404
    %408 = vrot.lane.b32.xlu0 %v406, 32
    %v409 = vpop.permute.xlu0 %408
    %411 = vst.msk [vmem:[#allocation6] sm:$0xff] %vm209, %v409
    %s412 = smul.u32 1, 2
    %s413 = smul.addr %s412, 8
    %s414 = scalar_lea.vmem [#allocation2], %s413
    %v415 = vld [vmem:[%s414] sm:$0xff]
    %v416 = vld [vmem:[%s414 + $0x8] sm:$0xff]
    %v417 = vsel %vm209, %v409, 0
    %419 = vmatprep.subr.mxu0 0.0
    %420 = vmatpush1.msra.mxu0 0.0
    %421 = vmatprep.subr.mxu0 0.0
    %422 = vmatpush1.msra.mxu0 0.0
    %423 = vmatprep.subr.mxu0 0.0
    %424 = vmatpush1.msra.mxu0 0.0
    %425 = vmatprep.subr.mxu0 0.0
    %426 = vmatpush1.msra.mxu0 0.0
    %427 = vmatprep.subr.mxu0 0.0
    %428 = vmatpush1.msra.mxu0 0.0
    %429 = vmatprep.subr.mxu0 0.0
    %430 = vmatpush1.msra.mxu0 0.0
    %431 = vmatprep.subr.mxu0 0.0
    %432 = vmatpush1.msra.mxu0 0.0
    %433 = vmatprep.subr.mxu0 0.0
    %434 = vmatpush1.msra.mxu0 0.0
    %435 = vmatprep.subr.mxu0 0.0
    %436 = vmatpush1.msra.mxu0 0.0
    %437 = vmatprep.subr.mxu0 0.0
    %438 = vmatpush1.msra.mxu0 0.0
    %439 = vmatprep.subr.mxu0 0.0
    %440 = vmatpush1.msra.mxu0 0.0
    %441 = vmatprep.subr.mxu0 0.0
    %442 = vmatpush1.msra.mxu0 0.0
    %443 = vmatprep.subr.mxu0 %v41
    %444 = vmatpush1.msra.mxu0 %v40
    %445 = vmatprep.subr.mxu0 %v39
    %446 = vmatpush1.msra.mxu0 %v38
    %447 = vmatprep.subr.mxu0 %v37
    %448 = vmatpush1.msra.mxu0 %v36
    %449 = vmatprep.subr.mxu0 %v35
    %450 = vmatpush1.msra.mxu0 %v34
    %451 = vmatprep.subr.mxu0 0.0
    %452 = vmatpush2.msra.mxu0 0.0
    %453 = vmatprep.subr.mxu0 0.0
    %454 = vmatpush2.msra.mxu0 0.0
    %455 = vmatprep.subr.mxu0 0.0
    %456 = vmatpush2.msra.mxu0 0.0
    %457 = vmatprep.subr.mxu0 0.0
    %458 = vmatpush2.msra.mxu0 0.0
    %459 = vmatprep.subr.mxu0 0.0
    %460 = vmatpush2.msra.mxu0 0.0
    %461 = vmatprep.subr.mxu0 0.0
    %462 = vmatpush2.msra.mxu0 0.0
    %463 = vmatprep.subr.mxu0 0.0
    %464 = vmatpush2.msra.mxu0 0.0
    %465 = vmatprep.subr.mxu0 0.0
    %466 = vmatpush2.msra.mxu0 0.0
    %467 = vmatprep.subr.mxu0 0.0
    %468 = vmatpush2.msra.mxu0 0.0
    %469 = vmatprep.subr.mxu0 0.0
    %470 = vmatpush2.msra.mxu0 0.0
    %471 = vmatprep.subr.mxu0 0.0
    %472 = vmatpush2.msra.mxu0 0.0
    %473 = vmatprep.subr.mxu0 0.0
    %474 = vmatpush2.msra.mxu0 0.0
    %475 = vmatprep.subr.mxu0 0.0
    %476 = vmatpush2.msra.mxu0 0.0
    %477 = vmatprep.subr.mxu0 0.0
    %478 = vmatpush2.msra.mxu0 0.0
    %479 = vmatprep.subr.mxu0 0.0
    %480 = vmatpush2.msra.mxu0 0.0
    %481 = vmatprep.subr.mxu0 0.0
    %482 = vmatpush2.msra.mxu0 0.0
    %483 = vmatprep.mubr.f32.mxu0 0.0
    %484 = vmatmul.mubr.f32.gmra.mxu0 %v417
    %v485 = vpop.f32.mrf.mxu0
    %v486 = vadd.f32 %v415, %v485
    %v487 = vpop.f32.mrf.mxu0
    %v488 = vadd.f32 %v416, %v487
    %489 = vdwg.mxu0
    %v490 = vxor.u32 %v486, 2147483648
    %v491 = vmul.f32 %v490, 1.442695
    %v492 = vpow.pop %v491
    %v493 = vadd.f32 %v492, 1.0
    %v494 = vrcp.pop %v493
    %v495 = vmul.f32 1.0, %v494
    %v496 = vtanh.pop %v486
    %v497 = vtanh.pop %v488
    %498 = vmatprep.subr.mxu0 0.0
    %499 = vmatpush1.msra.mxu0 0.0
    %500 = vmatprep.subr.mxu0 0.0
    %501 = vmatpush1.msra.mxu0 0.0
    %502 = vmatprep.subr.mxu0 0.0
    %503 = vmatpush1.msra.mxu0 0.0
    %504 = vmatprep.subr.mxu0 0.0
    %505 = vmatpush1.msra.mxu0 0.0
    %506 = vmatprep.subr.mxu0 0.0
    %507 = vmatpush1.msra.mxu0 0.0
    %508 = vmatprep.subr.mxu0 0.0
    %509 = vmatpush1.msra.mxu0 0.0
    %510 = vmatprep.subr.mxu0 0.0
    %511 = vmatpush1.msra.mxu0 0.0
    %512 = vmatprep.subr.mxu0 0.0
    %513 = vmatpush1.msra.mxu0 0.0
    %514 = vmatprep.subr.mxu0 0.0
    %515 = vmatpush1.msra.mxu0 0.0
    %516 = vmatprep.subr.mxu0 0.0
    %517 = vmatpush1.msra.mxu0 0.0
    %518 = vmatprep.subr.mxu0 0.0
    %519 = vmatpush1.msra.mxu0 0.0
    %520 = vmatprep.subr.mxu0 0.0
    %521 = vmatpush1.msra.mxu0 0.0
    %522 = vmatprep.subr.mxu0 0.0
    %523 = vmatpush1.msra.mxu0 0.0
    %524 = vmatprep.subr.mxu0 0.0
    %525 = vmatpush1.msra.mxu0 0.0
    %526 = vmatprep.subr.mxu0 0.0
    %527 = vmatpush1.msra.mxu0 0.0
    %528 = vmatprep.subr.mxu0 0.0
    %529 = vmatpush1.msra.mxu0 %v497
    %530 = vmatprep.subr.mxu0 0.0
    %531 = vmatpush2.msra.mxu0 0.0
    %532 = vmatprep.subr.mxu0 0.0
    %533 = vmatpush2.msra.mxu0 0.0
    %534 = vmatprep.subr.mxu0 0.0
    %535 = vmatpush2.msra.mxu0 0.0
    %536 = vmatprep.subr.mxu0 0.0
    %537 = vmatpush2.msra.mxu0 0.0
    %538 = vmatprep.subr.mxu0 0.0
    %539 = vmatpush2.msra.mxu0 0.0
    %540 = vmatprep.subr.mxu0 0.0
    %541 = vmatpush2.msra.mxu0 0.0
    %542 = vmatprep.subr.mxu0 0.0
    %543 = vmatpush2.msra.mxu0 0.0
    %544 = vmatprep.subr.mxu0 0.0
    %545 = vmatpush2.msra.mxu0 0.0
    %546 = vmatprep.subr.mxu0 0.0
    %547 = vmatpush2.msra.mxu0 0.0
    %548 = vmatprep.subr.mxu0 0.0
    %549 = vmatpush2.msra.mxu0 0.0
    %550 = vmatprep.subr.mxu0 0.0
    %551 = vmatpush2.msra.mxu0 0.0
    %552 = vmatprep.subr.mxu0 0.0
    %553 = vmatpush2.msra.mxu0 0.0
    %554 = vmatprep.subr.mxu0 0.0
    %555 = vmatpush2.msra.mxu0 0.0
    %556 = vmatprep.subr.mxu0 0.0
    %557 = vmatpush2.msra.mxu0 0.0
    %558 = vmatprep.subr.mxu0 0.0
    %559 = vmatpush2.msra.mxu0 0.0
    %560 = vmatprep.subr.mxu0 0.0
    %561 = vmatpush2.msra.mxu0 0.0
    %562 = vmatprep.mubr.f32.mxu0 0.0
    %563 = vmatmul.mubr.f32.gmra.mxu0 %v314
    %v564 = vpop.f32.mrf.mxu0
    %v565 = vadd.f32 0.0, %v564
    %v566 = vpop.f32.mrf.mxu0
    %567 = vdwg.mxu0
    %569 = vrot.lane.b32.xlu0 %v565, 32
    %v570 = vpop.permute.xlu0 %569
    %v572 = vadd.f32 %v400, %v570
    %v573 = vmul.f32 %v495, %v572
    %575 = vrot.lane.b32.xlu0 %v496, 64
    %v576 = vpop.permute.xlu0 %575
    %v578 = vmul.f32 %v495, %v576
    %580 = vrot.lane.b32.xlu0 %v578, 32
    %v581 = vpop.permute.xlu0 %580
    %v583 = vadd.f32 %v573, %v581
    %v584 = vtanh.pop %v583
    %586 = vrot.lane.b32.xlu0 %v584, 64
    %v587 = vpop.permute.xlu0 %586
    %v589 = vmul.f32 %v495, %v587
    %591 = vrot.lane.b32.xlu0 %v589, 32
    %v592 = vpop.permute.xlu0 %591
    %s594 = scalar_lea.vmem [#allocation6], 8
    %595 = vst.msk [vmem:[%s594] sm:$0xff] %vm209, %v592
    %s596 = smul.u32 2, 2
    %s597 = smul.addr %s596, 8
    %s598 = scalar_lea.vmem [#allocation2], %s597
    %v599 = vld [vmem:[%s598] sm:$0xff]
    %v600 = vld [vmem:[%s598 + $0x8] sm:$0xff]
    %v601 = vsel %vm209, %v592, 0
    %603 = vmatprep.subr.mxu0 0.0
    %604 = vmatpush1.msra.mxu0 0.0
    %605 = vmatprep.subr.mxu0 0.0
    %606 = vmatpush1.msra.mxu0 0.0
    %607 = vmatprep.subr.mxu0 0.0
    %608 = vmatpush1.msra.mxu0 0.0
    %609 = vmatprep.subr.mxu0 0.0
    %610 = vmatpush1.msra.mxu0 0.0
    %611 = vmatprep.subr.mxu0 0.0
    %612 = vmatpush1.msra.mxu0 0.0
    %613 = vmatprep.subr.mxu0 0.0
    %614 = vmatpush1.msra.mxu0 0.0
    %615 = vmatprep.subr.mxu0 0.0
    %616 = vmatpush1.msra.mxu0 0.0
    %617 = vmatprep.subr.mxu0 0.0
    %618 = vmatpush1.msra.mxu0 0.0
    %619 = vmatprep.subr.mxu0 0.0
    %620 = vmatpush1.msra.mxu0 0.0
    %621 = vmatprep.subr.mxu0 0.0
    %622 = vmatpush1.msra.mxu0 0.0
    %623 = vmatprep.subr.mxu0 0.0
    %624 = vmatpush1.msra.mxu0 0.0
    %625 = vmatprep.subr.mxu0 0.0
    %626 = vmatpush1.msra.mxu0 0.0
    %627 = vmatprep.subr.mxu0 %v41
    %628 = vmatpush1.msra.mxu0 %v40
    %629 = vmatprep.subr.mxu0 %v39
    %630 = vmatpush1.msra.mxu0 %v38
    %631 = vmatprep.subr.mxu0 %v37
    %632 = vmatpush1.msra.mxu0 %v36
    %633 = vmatprep.subr.mxu0 %v35
    %634 = vmatpush1.msra.mxu0 %v34
    %635 = vmatprep.subr.mxu0 0.0
    %636 = vmatpush2.msra.mxu0 0.0
    %637 = vmatprep.subr.mxu0 0.0
    %638 = vmatpush2.msra.mxu0 0.0
    %639 = vmatprep.subr.mxu0 0.0
    %640 = vmatpush2.msra.mxu0 0.0
    %641 = vmatprep.subr.mxu0 0.0
    %642 = vmatpush2.msra.mxu0 0.0
    %643 = vmatprep.subr.mxu0 0.0
    %644 = vmatpush2.msra.mxu0 0.0
    %645 = vmatprep.subr.mxu0 0.0
    %646 = vmatpush2.msra.mxu0 0.0
    %647 = vmatprep.subr.mxu0 0.0
    %648 = vmatpush2.msra.mxu0 0.0
    %649 = vmatprep.subr.mxu0 0.0
    %650 = vmatpush2.msra.mxu0 0.0
    %651 = vmatprep.subr.mxu0 0.0
    %652 = vmatpush2.msra.mxu0 0.0
    %653 = vmatprep.subr.mxu0 0.0
    %654 = vmatpush2.msra.mxu0 0.0
    %655 = vmatprep.subr.mxu0 0.0
    %656 = vmatpush2.msra.mxu0 0.0
    %657 = vmatprep.subr.mxu0 0.0
    %658 = vmatpush2.msra.mxu0 0.0
    %659 = vmatprep.subr.mxu0 0.0
    %660 = vmatpush2.msra.mxu0 0.0
    %661 = vmatprep.subr.mxu0 0.0
    %662 = vmatpush2.msra.mxu0 0.0
    %663 = vmatprep.subr.mxu0 0.0
    %664 = vmatpush2.msra.mxu0 0.0
    %665 = vmatprep.subr.mxu0 0.0
    %666 = vmatpush2.msra.mxu0 0.0
    %667 = vmatprep.mubr.f32.mxu0 0.0
    %668 = vmatmul.mubr.f32.gmra.mxu0 %v601
    %v669 = vpop.f32.mrf.mxu0
    %v670 = vadd.f32 %v599, %v669
    %v671 = vpop.f32.mrf.mxu0
    %v672 = vadd.f32 %v600, %v671
    %673 = vdwg.mxu0
    %v674 = vxor.u32 %v670, 2147483648
    %v675 = vmul.f32 %v674, 1.442695
    %v676 = vpow.pop %v675
    %v677 = vadd.f32 %v676, 1.0
    %v678 = vrcp.pop %v677
    %v679 = vmul.f32 1.0, %v678
    %v680 = vtanh.pop %v670
    %v681 = vtanh.pop %v672
    %682 = vmatprep.subr.mxu0 0.0
    %683 = vmatpush1.msra.mxu0 0.0
    %684 = vmatprep.subr.mxu0 0.0
    %685 = vmatpush1.msra.mxu0 0.0
    %686 = vmatprep.subr.mxu0 0.0
    %687 = vmatpush1.msra.mxu0 0.0
    %688 = vmatprep.subr.mxu0 0.0
    %689 = vmatpush1.msra.mxu0 0.0
    %690 = vmatprep.subr.mxu0 0.0
    %691 = vmatpush1.msra.mxu0 0.0
    %692 = vmatprep.subr.mxu0 0.0
    %693 = vmatpush1.msra.mxu0 0.0
    %694 = vmatprep.subr.mxu0 0.0
    %695 = vmatpush1.msra.mxu0 0.0
    %696 = vmatprep.subr.mxu0 0.0
    %697 = vmatpush1.msra.mxu0 0.0
    %698 = vmatprep.subr.mxu0 0.0
    %699 = vmatpush1.msra.mxu0 0.0
    %700 = vmatprep.subr.mxu0 0.0
    %701 = vmatpush1.msra.mxu0 0.0
    %702 = vmatprep.subr.mxu0 0.0
    %703 = vmatpush1.msra.mxu0 0.0
    %704 = vmatprep.subr.mxu0 0.0
    %705 = vmatpush1.msra.mxu0 0.0
    %706 = vmatprep.subr.mxu0 0.0
    %707 = vmatpush1.msra.mxu0 0.0
    %708 = vmatprep.subr.mxu0 0.0
    %709 = vmatpush1.msra.mxu0 0.0
    %710 = vmatprep.subr.mxu0 0.0
    %711 = vmatpush1.msra.mxu0 0.0
    %712 = vmatprep.subr.mxu0 0.0
    %713 = vmatpush1.msra.mxu0 %v681
    %714 = vmatprep.subr.mxu0 0.0
    %715 = vmatpush2.msra.mxu0 0.0
    %716 = vmatprep.subr.mxu0 0.0
    %717 = vmatpush2.msra.mxu0 0.0
    %718 = vmatprep.subr.mxu0 0.0
    %719 = vmatpush2.msra.mxu0 0.0
    %720 = vmatprep.subr.mxu0 0.0
    %721 = vmatpush2.msra.mxu0 0.0
    %722 = vmatprep.subr.mxu0 0.0
    %723 = vmatpush2.msra.mxu0 0.0
    %724 = vmatprep.subr.mxu0 0.0
    %725 = vmatpush2.msra.mxu0 0.0
    %726 = vmatprep.subr.mxu0 0.0
    %727 = vmatpush2.msra.mxu0 0.0
    %728 = vmatprep.subr.mxu0 0.0
    %729 = vmatpush2.msra.mxu0 0.0
    %730 = vmatprep.subr.mxu0 0.0
    %731 = vmatpush2.msra.mxu0 0.0
    %732 = vmatprep.subr.mxu0 0.0
    %733 = vmatpush2.msra.mxu0 0.0
    %734 = vmatprep.subr.mxu0 0.0
    %735 = vmatpush2.msra.mxu0 0.0
    %736 = vmatprep.subr.mxu0 0.0
    %737 = vmatpush2.msra.mxu0 0.0
    %738 = vmatprep.subr.mxu0 0.0
    %739 = vmatpush2.msra.mxu0 0.0
    %740 = vmatprep.subr.mxu0 0.0
    %741 = vmatpush2.msra.mxu0 0.0
    %742 = vmatprep.subr.mxu0 0.0
    %743 = vmatpush2.msra.mxu0 0.0
    %744 = vmatprep.subr.mxu0 0.0
    %745 = vmatpush2.msra.mxu0 0.0
    %746 = vmatprep.mubr.f32.mxu0 0.0
    %747 = vmatmul.mubr.f32.gmra.mxu0 %v314
    %v748 = vpop.f32.mrf.mxu0
    %v749 = vadd.f32 0.0, %v748
    %v750 = vpop.f32.mrf.mxu0
    %751 = vdwg.mxu0
    %753 = vrot.lane.b32.xlu0 %v749, 32
    %v754 = vpop.permute.xlu0 %753
    %v756 = vadd.f32 %v583, %v754
    %v757 = vmul.f32 %v679, %v756
    %759 = vrot.lane.b32.xlu0 %v680, 64
    %v760 = vpop.permute.xlu0 %759
    %v762 = vmul.f32 %v679, %v760
    %764 = vrot.lane.b32.xlu0 %v762, 32
    %v765 = vpop.permute.xlu0 %764
    %v767 = vadd.f32 %v757, %v765
    %v768 = vtanh.pop %v767
    %770 = vrot.lane.b32.xlu0 %v768, 64
    %v771 = vpop.permute.xlu0 %770
    %v773 = vmul.f32 %v679, %v771
    %775 = vrot.lane.b32.xlu0 %v773, 32
    %v776 = vpop.permute.xlu0 %775
    %s778 = scalar_lea.vmem [#allocation6], 16
    %779 = vst.msk [vmem:[%s778] sm:$0xff] %vm209, %v776
    %s780 = smul.u32 3, 2
    %s781 = smul.addr %s780, 8
    %s782 = scalar_lea.vmem [#allocation2], %s781
    %v783 = vld [vmem:[%s782] sm:$0xff]
    %v784 = vld [vmem:[%s782 + $0x8] sm:$0xff]
    %v785 = vsel %vm209, %v776, 0
    %787 = vmatprep.subr.mxu0 0.0
    %788 = vmatpush1.msra.mxu0 0.0
    %789 = vmatprep.subr.mxu0 0.0
    %790 = vmatpush1.msra.mxu0 0.0
    %791 = vmatprep.subr.mxu0 0.0
    %792 = vmatpush1.msra.mxu0 0.0
    %793 = vmatprep.subr.mxu0 0.0
    %794 = vmatpush1.msra.mxu0 0.0
    %795 = vmatprep.subr.mxu0 0.0
    %796 = vmatpush1.msra.mxu0 0.0
    %797 = vmatprep.subr.mxu0 0.0
    %798 = vmatpush1.msra.mxu0 0.0
    %799 = vmatprep.subr.mxu0 0.0
    %800 = vmatpush1.msra.mxu0 0.0
    %801 = vmatprep.subr.mxu0 0.0
    %802 = vmatpush1.msra.mxu0 0.0
    %803 = vmatprep.subr.mxu0 0.0
    %804 = vmatpush1.msra.mxu0 0.0
    %805 = vmatprep.subr.mxu0 0.0
    %806 = vmatpush1.msra.mxu0 0.0
    %807 = vmatprep.subr.mxu0 0.0
    %808 = vmatpush1.msra.mxu0 0.0
    %809 = vmatprep.subr.mxu0 0.0
    %810 = vmatpush1.msra.mxu0 0.0
    %811 = vmatprep.subr.mxu0 %v41
    %812 = vmatpush1.msra.mxu0 %v40
    %813 = vmatprep.subr.mxu0 %v39
    %814 = vmatpush1.msra.mxu0 %v38
    %815 = vmatprep.subr.mxu0 %v37
    %816 = vmatpush1.msra.mxu0 %v36
    %817 = vmatprep.subr.mxu0 %v35
    %818 = vmatpush1.msra.mxu0 %v34
    %819 = vmatprep.subr.mxu0 0.0
    %820 = vmatpush2.msra.mxu0 0.0
    %821 = vmatprep.subr.mxu0 0.0
    %822 = vmatpush2.msra.mxu0 0.0
    %823 = vmatprep.subr.mxu0 0.0
    %824 = vmatpush2.msra.mxu0 0.0
    %825 = vmatprep.subr.mxu0 0.0
    %826 = vmatpush2.msra.mxu0 0.0
    %827 = vmatprep.subr.mxu0 0.0
    %828 = vmatpush2.msra.mxu0 0.0
    %829 = vmatprep.subr.mxu0 0.0
    %830 = vmatpush2.msra.mxu0 0.0
    %831 = vmatprep.subr.mxu0 0.0
    %832 = vmatpush2.msra.mxu0 0.0
    %833 = vmatprep.subr.mxu0 0.0
    %834 = vmatpush2.msra.mxu0 0.0
    %835 = vmatprep.subr.mxu0 0.0
    %836 = vmatpush2.msra.mxu0 0.0
    %837 = vmatprep.subr.mxu0 0.0
    %838 = vmatpush2.msra.mxu0 0.0
    %839 = vmatprep.subr.mxu0 0.0
    %840 = vmatpush2.msra.mxu0 0.0
    %841 = vmatprep.subr.mxu0 0.0
    %842 = vmatpush2.msra.mxu0 0.0
    %843 = vmatprep.subr.mxu0 0.0
    %844 = vmatpush2.msra.mxu0 0.0
    %845 = vmatprep.subr.mxu0 0.0
    %846 = vmatpush2.msra.mxu0 0.0
    %847 = vmatprep.subr.mxu0 0.0
    %848 = vmatpush2.msra.mxu0 0.0
    %849 = vmatprep.subr.mxu0 0.0
    %850 = vmatpush2.msra.mxu0 0.0
    %851 = vmatprep.mubr.f32.mxu0 0.0
    %852 = vmatmul.mubr.f32.gmra.mxu0 %v785
    %v853 = vpop.f32.mrf.mxu0
    %v854 = vadd.f32 %v783, %v853
    %v855 = vpop.f32.mrf.mxu0
    %v856 = vadd.f32 %v784, %v855
    %857 = vdwg.mxu0
    %v858 = vxor.u32 %v854, 2147483648
    %v859 = vmul.f32 %v858, 1.442695
    %v860 = vpow.pop %v859
    %v861 = vadd.f32 %v860, 1.0
    %v862 = vrcp.pop %v861
    %v863 = vmul.f32 1.0, %v862
    %v864 = vtanh.pop %v854
    %v865 = vtanh.pop %v856
    %866 = vmatprep.subr.mxu0 0.0
    %867 = vmatpush1.msra.mxu0 0.0
    %868 = vmatprep.subr.mxu0 0.0
    %869 = vmatpush1.msra.mxu0 0.0
    %870 = vmatprep.subr.mxu0 0.0
    %871 = vmatpush1.msra.mxu0 0.0
    %872 = vmatprep.subr.mxu0 0.0
    %873 = vmatpush1.msra.mxu0 0.0
    %874 = vmatprep.subr.mxu0 0.0
    %875 = vmatpush1.msra.mxu0 0.0
    %876 = vmatprep.subr.mxu0 0.0
    %877 = vmatpush1.msra.mxu0 0.0
    %878 = vmatprep.subr.mxu0 0.0
    %879 = vmatpush1.msra.mxu0 0.0
    %880 = vmatprep.subr.mxu0 0.0
    %881 = vmatpush1.msra.mxu0 0.0
    %882 = vmatprep.subr.mxu0 0.0
    %883 = vmatpush1.msra.mxu0 0.0
    %884 = vmatprep.subr.mxu0 0.0
    %885 = vmatpush1.msra.mxu0 0.0
    %886 = vmatprep.subr.mxu0 0.0
    %887 = vmatpush1.msra.mxu0 0.0
    %888 = vmatprep.subr.mxu0 0.0
    %889 = vmatpush1.msra.mxu0 0.0
    %890 = vmatprep.subr.mxu0 0.0
    %891 = vmatpush1.msra.mxu0 0.0
    %892 = vmatprep.subr.mxu0 0.0
    %893 = vmatpush1.msra.mxu0 0.0
    %894 = vmatprep.subr.mxu0 0.0
    %895 = vmatpush1.msra.mxu0 0.0
    %896 = vmatprep.subr.mxu0 0.0
    %897 = vmatpush1.msra.mxu0 %v865
    %898 = vmatprep.subr.mxu0 0.0
    %899 = vmatpush2.msra.mxu0 0.0
    %900 = vmatprep.subr.mxu0 0.0
    %901 = vmatpush2.msra.mxu0 0.0
    %902 = vmatprep.subr.mxu0 0.0
    %903 = vmatpush2.msra.mxu0 0.0
    %904 = vmatprep.subr.mxu0 0.0
    %905 = vmatpush2.msra.mxu0 0.0
    %906 = vmatprep.subr.mxu0 0.0
    %907 = vmatpush2.msra.mxu0 0.0
    %908 = vmatprep.subr.mxu0 0.0
    %909 = vmatpush2.msra.mxu0 0.0
    %910 = vmatprep.subr.mxu0 0.0
    %911 = vmatpush2.msra.mxu0 0.0
    %912 = vmatprep.subr.mxu0 0.0
    %913 = vmatpush2.msra.mxu0 0.0
    %914 = vmatprep.subr.mxu0 0.0
    %915 = vmatpush2.msra.mxu0 0.0
    %916 = vmatprep.subr.mxu0 0.0
    %917 = vmatpush2.msra.mxu0 0.0
    %918 = vmatprep.subr.mxu0 0.0
    %919 = vmatpush2.msra.mxu0 0.0
    %920 = vmatprep.subr.mxu0 0.0
    %921 = vmatpush2.msra.mxu0 0.0
    %922 = vmatprep.subr.mxu0 0.0
    %923 = vmatpush2.msra.mxu0 0.0
    %924 = vmatprep.subr.mxu0 0.0
    %925 = vmatpush2.msra.mxu0 0.0
    %926 = vmatprep.subr.mxu0 0.0
    %927 = vmatpush2.msra.mxu0 0.0
    %928 = vmatprep.subr.mxu0 0.0
    %929 = vmatpush2.msra.mxu0 0.0
    %930 = vmatprep.mubr.f32.mxu0 0.0
    %931 = vmatmul.mubr.f32.gmra.mxu0 %v314
    %v932 = vpop.f32.mrf.mxu0
    %v933 = vadd.f32 0.0, %v932
    %v934 = vpop.f32.mrf.mxu0
    %935 = vdwg.mxu0
    %937 = vrot.lane.b32.xlu0 %v933, 32
    %v938 = vpop.permute.xlu0 %937
    %v940 = vadd.f32 %v767, %v938
    %v941 = vmul.f32 %v863, %v940
    %943 = vrot.lane.b32.xlu0 %v864, 64
    %v944 = vpop.permute.xlu0 %943
    %v946 = vmul.f32 %v863, %v944
    %948 = vrot.lane.b32.xlu0 %v946, 32
    %v949 = vpop.permute.xlu0 %948
    %v951 = vadd.f32 %v941, %v949
    %v952 = vtanh.pop %v951
    %954 = vrot.lane.b32.xlu0 %v952, 64
    %v955 = vpop.permute.xlu0 %954
    %v957 = vmul.f32 %v863, %v955
    %959 = vrot.lane.b32.xlu0 %v957, 32
    %v960 = vpop.permute.xlu0 %959
    %s962 = scalar_lea.vmem [#allocation6], 24
    %963 = vst.msk [vmem:[%s962] sm:$0xff] %vm209, %v960
    %s964 = smul.u32 4, 2
    %s965 = smul.addr %s964, 8
    %s966 = scalar_lea.vmem [#allocation2], %s965
    %v967 = vld [vmem:[%s966] sm:$0xff]
    %v968 = vld [vmem:[%s966 + $0x8] sm:$0xff]
    %v969 = vsel %vm209, %v960, 0
    %971 = vmatprep.subr.mxu0 0.0
    %972 = vmatpush1.msra.mxu0 0.0
    %973 = vmatprep.subr.mxu0 0.0
    %974 = vmatpush1.msra.mxu0 0.0
    %975 = vmatprep.subr.mxu0 0.0
    %976 = vmatpush1.msra.mxu0 0.0
    %977 = vmatprep.subr.mxu0 0.0
    %978 = vmatpush1.msra.mxu0 0.0
    %979 = vmatprep.subr.mxu0 0.0
    %980 = vmatpush1.msra.mxu0 0.0
    %981 = vmatprep.subr.mxu0 0.0
    %982 = vmatpush1.msra.mxu0 0.0
    %983 = vmatprep.subr.mxu0 0.0
    %984 = vmatpush1.msra.mxu0 0.0
    %985 = vmatprep.subr.mxu0 0.0
    %986 = vmatpush1.msra.mxu0 0.0
    %987 = vmatprep.subr.mxu0 0.0
    %988 = vmatpush1.msra.mxu0 0.0
    %989 = vmatprep.subr.mxu0 0.0
    %990 = vmatpush1.msra.mxu0 0.0
    %991 = vmatprep.subr.mxu0 0.0
    %992 = vmatpush1.msra.mxu0 0.0
    %993 = vmatprep.subr.mxu0 0.0
    %994 = vmatpush1.msra.mxu0 0.0
    %995 = vmatprep.subr.mxu0 %v41
    %996 = vmatpush1.msra.mxu0 %v40
    %997 = vmatprep.subr.mxu0 %v39
    %998 = vmatpush1.msra.mxu0 %v38
    %999 = vmatprep.subr.mxu0 %v37
    %1000 = vmatpush1.msra.mxu0 %v36
    %1001 = vmatprep.subr.mxu0 %v35
    %1002 = vmatpush1.msra.mxu0 %v34
    %1003 = vmatprep.subr.mxu0 0.0
    %1004 = vmatpush2.msra.mxu0 0.0
    %1005 = vmatprep.subr.mxu0 0.0
    %1006 = vmatpush2.msra.mxu0 0.0
    %1007 = vmatprep.subr.mxu0 0.0
    %1008 = vmatpush2.msra.mxu0 0.0
    %1009 = vmatprep.subr.mxu0 0.0
    %1010 = vmatpush2.msra.mxu0 0.0
    %1011 = vmatprep.subr.mxu0 0.0
    %1012 = vmatpush2.msra.mxu0 0.0
    %1013 = vmatprep.subr.mxu0 0.0
    %1014 = vmatpush2.msra.mxu0 0.0
    %1015 = vmatprep.subr.mxu0 0.0
    %1016 = vmatpush2.msra.mxu0 0.0
    %1017 = vmatprep.subr.mxu0 0.0
    %1018 = vmatpush2.msra.mxu0 0.0
    %1019 = vmatprep.subr.mxu0 0.0
    %1020 = vmatpush2.msra.mxu0 0.0
    %1021 = vmatprep.subr.mxu0 0.0
    %1022 = vmatpush2.msra.mxu0 0.0
    %1023 = vmatprep.subr.mxu0 0.0
    %1024 = vmatpush2.msra.mxu0 0.0
    %1025 = vmatprep.subr.mxu0 0.0
    %1026 = vmatpush2.msra.mxu0 0.0
    %1027 = vmatprep.subr.mxu0 0.0
    %1028 = vmatpush2.msra.mxu0 0.0
    %1029 = vmatprep.subr.mxu0 0.0
    %1030 = vmatpush2.msra.mxu0 0.0
    %1031 = vmatprep.subr.mxu0 0.0
    %1032 = vmatpush2.msra.mxu0 0.0
    %1033 = vmatprep.subr.mxu0 0.0
    %1034 = vmatpush2.msra.mxu0 0.0
    %1035 = vmatprep.mubr.f32.mxu0 0.0
    %1036 = vmatmul.mubr.f32.gmra.mxu0 %v969
    %v1037 = vpop.f32.mrf.mxu0
    %v1038 = vadd.f32 %v967, %v1037
    %v1039 = vpop.f32.mrf.mxu0
    %v1040 = vadd.f32 %v968, %v1039
    %1041 = vdwg.mxu0
    %v1042 = vxor.u32 %v1038, 2147483648
    %v1043 = vmul.f32 %v1042, 1.442695
    %v1044 = vpow.pop %v1043
    %v1045 = vadd.f32 %v1044, 1.0
    %v1046 = vrcp.pop %v1045
    %v1047 = vmul.f32 1.0, %v1046
    %v1048 = vtanh.pop %v1038
    %v1049 = vtanh.pop %v1040
    %1050 = vmatprep.subr.mxu0 0.0
    %1051 = vmatpush1.msra.mxu0 0.0
    %1052 = vmatprep.subr.mxu0 0.0
    %1053 = vmatpush1.msra.mxu0 0.0
    %1054 = vmatprep.subr.mxu0 0.0
    %1055 = vmatpush1.msra.mxu0 0.0
    %1056 = vmatprep.subr.mxu0 0.0
    %1057 = vmatpush1.msra.mxu0 0.0
    %1058 = vmatprep.subr.mxu0 0.0
    %1059 = vmatpush1.msra.mxu0 0.0
    %1060 = vmatprep.subr.mxu0 0.0
    %1061 = vmatpush1.msra.mxu0 0.0
    %1062 = vmatprep.subr.mxu0 0.0
    %1063 = vmatpush1.msra.mxu0 0.0
    %1064 = vmatprep.subr.mxu0 0.0
    %1065 = vmatpush1.msra.mxu0 0.0
    %1066 = vmatprep.subr.mxu0 0.0
    %1067 = vmatpush1.msra.mxu0 0.0
    %1068 = vmatprep.subr.mxu0 0.0
    %1069 = vmatpush1.msra.mxu0 0.0
    %1070 = vmatprep.subr.mxu0 0.0
    %1071 = vmatpush1.msra.mxu0 0.0
    %1072 = vmatprep.subr.mxu0 0.0
    %1073 = vmatpush1.msra.mxu0 0.0
    %1074 = vmatprep.subr.mxu0 0.0
    %1075 = vmatpush1.msra.mxu0 0.0
    %1076 = vmatprep.subr.mxu0 0.0
    %1077 = vmatpush1.msra.mxu0 0.0
    %1078 = vmatprep.subr.mxu0 0.0
    %1079 = vmatpush1.msra.mxu0 0.0
    %1080 = vmatprep.subr.mxu0 0.0
    %1081 = vmatpush1.msra.mxu0 %v1049
    %1082 = vmatprep.subr.mxu0 0.0
    %1083 = vmatpush2.msra.mxu0 0.0
    %1084 = vmatprep.subr.mxu0 0.0
    %1085 = vmatpush2.msra.mxu0 0.0
    %1086 = vmatprep.subr.mxu0 0.0
    %1087 = vmatpush2.msra.mxu0 0.0
    %1088 = vmatprep.subr.mxu0 0.0
    %1089 = vmatpush2.msra.mxu0 0.0
    %1090 = vmatprep.subr.mxu0 0.0
    %1091 = vmatpush2.msra.mxu0 0.0
    %1092 = vmatprep.subr.mxu0 0.0
    %1093 = vmatpush2.msra.mxu0 0.0
    %1094 = vmatprep.subr.mxu0 0.0
    %1095 = vmatpush2.msra.mxu0 0.0
    %1096 = vmatprep.subr.mxu0 0.0
    %1097 = vmatpush2.msra.mxu0 0.0
    %1098 = vmatprep.subr.mxu0 0.0
    %1099 = vmatpush2.msra.mxu0 0.0
    %1100 = vmatprep.subr.mxu0 0.0
    %1101 = vmatpush2.msra.mxu0 0.0
    %1102 = vmatprep.subr.mxu0 0.0
    %1103 = vmatpush2.msra.mxu0 0.0
    %1104 = vmatprep.subr.mxu0 0.0
    %1105 = vmatpush2.msra.mxu0 0.0
    %1106 = vmatprep.subr.mxu0 0.0
    %1107 = vmatpush2.msra.mxu0 0.0
    %1108 = vmatprep.subr.mxu0 0.0
    %1109 = vmatpush2.msra.mxu0 0.0
    %1110 = vmatprep.subr.mxu0 0.0
    %1111 = vmatpush2.msra.mxu0 0.0
    %1112 = vmatprep.subr.mxu0 0.0
    %1113 = vmatpush2.msra.mxu0 0.0
    %1114 = vmatprep.mubr.f32.mxu0 0.0
    %1115 = vmatmul.mubr.f32.gmra.mxu0 %v314
    %v1116 = vpop.f32.mrf.mxu0
    %v1117 = vadd.f32 0.0, %v1116
    %v1118 = vpop.f32.mrf.mxu0
    %1119 = vdwg.mxu0
    %1121 = vrot.lane.b32.xlu0 %v1117, 32
    %v1122 = vpop.permute.xlu0 %1121
    %v1124 = vadd.f32 %v951, %v1122
    %v1125 = vmul.f32 %v1047, %v1124
    %1127 = vrot.lane.b32.xlu0 %v1048, 64
    %v1128 = vpop.permute.xlu0 %1127
    %v1130 = vmul.f32 %v1047, %v1128
    %1132 = vrot.lane.b32.xlu0 %v1130, 32
    %v1133 = vpop.permute.xlu0 %1132
    %v1135 = vadd.f32 %v1125, %v1133
    %v1136 = vtanh.pop %v1135
    %1138 = vrot.lane.b32.xlu0 %v1136, 64
    %v1139 = vpop.permute.xlu0 %1138
    %v1141 = vmul.f32 %v1047, %v1139
    %1143 = vrot.lane.b32.xlu0 %v1141, 32
    %v1144 = vpop.permute.xlu0 %1143
    %s1146 = scalar_lea.vmem [#allocation6], 32
    %1147 = vst.msk [vmem:[%s1146] sm:$0xff] %vm209, %v1144
    %s1148 = smul.u32 5, 2
    %s1149 = smul.addr %s1148, 8
    %s1150 = scalar_lea.vmem [#allocation2], %s1149
    %v1151 = vld [vmem:[%s1150] sm:$0xff]
    %v1152 = vld [vmem:[%s1150 + $0x8] sm:$0xff]
    %v1153 = vsel %vm209, %v1144, 0
    %1155 = vmatprep.subr.mxu0 0.0
    %1156 = vmatpush1.msra.mxu0 0.0
    %1157 = vmatprep.subr.mxu0 0.0
    %1158 = vmatpush1.msra.mxu0 0.0
    %1159 = vmatprep.subr.mxu0 0.0
    %1160 = vmatpush1.msra.mxu0 0.0
    %1161 = vmatprep.subr.mxu0 0.0
    %1162 = vmatpush1.msra.mxu0 0.0
    %1163 = vmatprep.subr.mxu0 0.0
    %1164 = vmatpush1.msra.mxu0 0.0
    %1165 = vmatprep.subr.mxu0 0.0
    %1166 = vmatpush1.msra.mxu0 0.0
    %1167 = vmatprep.subr.mxu0 0.0
    %1168 = vmatpush1.msra.mxu0 0.0
    %1169 = vmatprep.subr.mxu0 0.0
    %1170 = vmatpush1.msra.mxu0 0.0
    %1171 = vmatprep.subr.mxu0 0.0
    %1172 = vmatpush1.msra.mxu0 0.0
    %1173 = vmatprep.subr.mxu0 0.0
    %1174 = vmatpush1.msra.mxu0 0.0
    %1175 = vmatprep.subr.mxu0 0.0
    %1176 = vmatpush1.msra.mxu0 0.0
    %1177 = vmatprep.subr.mxu0 0.0
    %1178 = vmatpush1.msra.mxu0 0.0
    %1179 = vmatprep.subr.mxu0 %v41
    %1180 = vmatpush1.msra.mxu0 %v40
    %1181 = vmatprep.subr.mxu0 %v39
    %1182 = vmatpush1.msra.mxu0 %v38
    %1183 = vmatprep.subr.mxu0 %v37
    %1184 = vmatpush1.msra.mxu0 %v36
    %1185 = vmatprep.subr.mxu0 %v35
    %1186 = vmatpush1.msra.mxu0 %v34
    %1187 = vmatprep.subr.mxu0 0.0
    %1188 = vmatpush2.msra.mxu0 0.0
    %1189 = vmatprep.subr.mxu0 0.0
    %1190 = vmatpush2.msra.mxu0 0.0
    %1191 = vmatprep.subr.mxu0 0.0
    %1192 = vmatpush2.msra.mxu0 0.0
    %1193 = vmatprep.subr.mxu0 0.0
    %1194 = vmatpush2.msra.mxu0 0.0
    %1195 = vmatprep.subr.mxu0 0.0
    %1196 = vmatpush2.msra.mxu0 0.0
    %1197 = vmatprep.subr.mxu0 0.0
    %1198 = vmatpush2.msra.mxu0 0.0
    %1199 = vmatprep.subr.mxu0 0.0
    %1200 = vmatpush2.msra.mxu0 0.0
    %1201 = vmatprep.subr.mxu0 0.0
    %1202 = vmatpush2.msra.mxu0 0.0
    %1203 = vmatprep.subr.mxu0 0.0
    %1204 = vmatpush2.msra.mxu0 0.0
    %1205 = vmatprep.subr.mxu0 0.0
    %1206 = vmatpush2.msra.mxu0 0.0
    %1207 = vmatprep.subr.mxu0 0.0
    %1208 = vmatpush2.msra.mxu0 0.0
    %1209 = vmatprep.subr.mxu0 0.0
    %1210 = vmatpush2.msra.mxu0 0.0
    %1211 = vmatprep.subr.mxu0 0.0
    %1212 = vmatpush2.msra.mxu0 0.0
    %1213 = vmatprep.subr.mxu0 0.0
    %1214 = vmatpush2.msra.mxu0 0.0
    %1215 = vmatprep.subr.mxu0 0.0
    %1216 = vmatpush2.msra.mxu0 0.0
    %1217 = vmatprep.subr.mxu0 0.0
    %1218 = vmatpush2.msra.mxu0 0.0
    %1219 = vmatprep.mubr.f32.mxu0 0.0
    %1220 = vmatmul.mubr.f32.gmra.mxu0 %v1153
    %v1221 = vpop.f32.mrf.mxu0
    %v1222 = vadd.f32 %v1151, %v1221
    %v1223 = vpop.f32.mrf.mxu0
    %v1224 = vadd.f32 %v1152, %v1223
    %1225 = vdwg.mxu0
    %v1226 = vxor.u32 %v1222, 2147483648
    %v1227 = vmul.f32 %v1226, 1.442695
    %v1228 = vpow.pop %v1227
    %v1229 = vadd.f32 %v1228, 1.0
    %v1230 = vrcp.pop %v1229
    %v1231 = vmul.f32 1.0, %v1230
    %v1232 = vtanh.pop %v1222
    %v1233 = vtanh.pop %v1224
    %1234 = vmatprep.subr.mxu0 0.0
    %1235 = vmatpush1.msra.mxu0 0.0
    %1236 = vmatprep.subr.mxu0 0.0
    %1237 = vmatpush1.msra.mxu0 0.0
    %1238 = vmatprep.subr.mxu0 0.0
    %1239 = vmatpush1.msra.mxu0 0.0
    %1240 = vmatprep.subr.mxu0 0.0
    %1241 = vmatpush1.msra.mxu0 0.0
    %1242 = vmatprep.subr.mxu0 0.0
    %1243 = vmatpush1.msra.mxu0 0.0
    %1244 = vmatprep.subr.mxu0 0.0
    %1245 = vmatpush1.msra.mxu0 0.0
    %1246 = vmatprep.subr.mxu0 0.0
    %1247 = vmatpush1.msra.mxu0 0.0
    %1248 = vmatprep.subr.mxu0 0.0
    %1249 = vmatpush1.msra.mxu0 0.0
    %1250 = vmatprep.subr.mxu0 0.0
    %1251 = vmatpush1.msra.mxu0 0.0
    %1252 = vmatprep.subr.mxu0 0.0
    %1253 = vmatpush1.msra.mxu0 0.0
    %1254 = vmatprep.subr.mxu0 0.0
    %1255 = vmatpush1.msra.mxu0 0.0
    %1256 = vmatprep.subr.mxu0 0.0
    %1257 = vmatpush1.msra.mxu0 0.0
    %1258 = vmatprep.subr.mxu0 0.0
    %1259 = vmatpush1.msra.mxu0 0.0
    %1260 = vmatprep.subr.mxu0 0.0
    %1261 = vmatpush1.msra.mxu0 0.0
    %1262 = vmatprep.subr.mxu0 0.0
    %1263 = vmatpush1.msra.mxu0 0.0
    %1264 = vmatprep.subr.mxu0 0.0
    %1265 = vmatpush1.msra.mxu0 %v1233
    %1266 = vmatprep.subr.mxu0 0.0
    %1267 = vmatpush2.msra.mxu0 0.0
    %1268 = vmatprep.subr.mxu0 0.0
    %1269 = vmatpush2.msra.mxu0 0.0
    %1270 = vmatprep.subr.mxu0 0.0
    %1271 = vmatpush2.msra.mxu0 0.0
    %1272 = vmatprep.subr.mxu0 0.0
    %1273 = vmatpush2.msra.mxu0 0.0
    %1274 = vmatprep.subr.mxu0 0.0
    %1275 = vmatpush2.msra.mxu0 0.0
    %1276 = vmatprep.subr.mxu0 0.0
    %1277 = vmatpush2.msra.mxu0 0.0
    %1278 = vmatprep.subr.mxu0 0.0
    %1279 = vmatpush2.msra.mxu0 0.0
    %1280 = vmatprep.subr.mxu0 0.0
    %1281 = vmatpush2.msra.mxu0 0.0
    %1282 = vmatprep.subr.mxu0 0.0
    %1283 = vmatpush2.msra.mxu0 0.0
    %1284 = vmatprep.subr.mxu0 0.0
    %1285 = vmatpush2.msra.mxu0 0.0
    %1286 = vmatprep.subr.mxu0 0.0
    %1287 = vmatpush2.msra.mxu0 0.0
    %1288 = vmatprep.subr.mxu0 0.0
    %1289 = vmatpush2.msra.mxu0 0.0
    %1290 = vmatprep.subr.mxu0 0.0
    %1291 = vmatpush2.msra.mxu0 0.0
    %1292 = vmatprep.subr.mxu0 0.0
    %1293 = vmatpush2.msra.mxu0 0.0
    %1294 = vmatprep.subr.mxu0 0.0
    %1295 = vmatpush2.msra.mxu0 0.0
    %1296 = vmatprep.subr.mxu0 0.0
    %1297 = vmatpush2.msra.mxu0 0.0
    %1298 = vmatprep.mubr.f32.mxu0 0.0
    %1299 = vmatmul.mubr.f32.gmra.mxu0 %v314
    %v1300 = vpop.f32.mrf.mxu0
    %v1301 = vadd.f32 0.0, %v1300
    %v1302 = vpop.f32.mrf.mxu0
    %1303 = vdwg.mxu0
    %1305 = vrot.lane.b32.xlu0 %v1301, 32
    %v1306 = vpop.permute.xlu0 %1305
    %v1308 = vadd.f32 %v1135, %v1306
    %v1309 = vmul.f32 %v1231, %v1308
    %1311 = vrot.lane.b32.xlu0 %v1232, 64
    %v1312 = vpop.permute.xlu0 %1311
    %v1314 = vmul.f32 %v1231, %v1312
    %1316 = vrot.lane.b32.xlu0 %v1314, 32
    %v1317 = vpop.permute.xlu0 %1316
    %v1319 = vadd.f32 %v1309, %v1317
    %v1320 = vtanh.pop %v1319
    %1322 = vrot.lane.b32.xlu0 %v1320, 64
    %v1323 = vpop.permute.xlu0 %1322
    %v1325 = vmul.f32 %v1231, %v1323
    %1327 = vrot.lane.b32.xlu0 %v1325, 32
    %v1328 = vpop.permute.xlu0 %1327
    %s1330 = scalar_lea.vmem [#allocation6], 40
    %1331 = vst.msk [vmem:[%s1330] sm:$0xff] %vm209, %v1328
    %s1332 = smul.u32 6, 2
    %s1333 = smul.addr %s1332, 8
    %s1334 = scalar_lea.vmem [#allocation2], %s1333
    %v1335 = vld [vmem:[%s1334] sm:$0xff]
    %v1336 = vld [vmem:[%s1334 + $0x8] sm:$0xff]
    %v1337 = vsel %vm209, %v1328, 0
    %1339 = vmatprep.subr.mxu0 0.0
    %1340 = vmatpush1.msra.mxu0 0.0
    %1341 = vmatprep.subr.mxu0 0.0
    %1342 = vmatpush1.msra.mxu0 0.0
    %1343 = vmatprep.subr.mxu0 0.0
    %1344 = vmatpush1.msra.mxu0 0.0
    %1345 = vmatprep.subr.mxu0 0.0
    %1346 = vmatpush1.msra.mxu0 0.0
    %1347 = vmatprep.subr.mxu0 0.0
    %1348 = vmatpush1.msra.mxu0 0.0
    %1349 = vmatprep.subr.mxu0 0.0
    %1350 = vmatpush1.msra.mxu0 0.0
    %1351 = vmatprep.subr.mxu0 0.0
    %1352 = vmatpush1.msra.mxu0 0.0
    %1353 = vmatprep.subr.mxu0 0.0
    %1354 = vmatpush1.msra.mxu0 0.0
    %1355 = vmatprep.subr.mxu0 0.0
    %1356 = vmatpush1.msra.mxu0 0.0
    %1357 = vmatprep.subr.mxu0 0.0
    %1358 = vmatpush1.msra.mxu0 0.0
    %1359 = vmatprep.subr.mxu0 0.0
    %1360 = vmatpush1.msra.mxu0 0.0
    %1361 = vmatprep.subr.mxu0 0.0
    %1362 = vmatpush1.msra.mxu0 0.0
    %1363 = vmatprep.subr.mxu0 %v41
    %1364 = vmatpush1.msra.mxu0 %v40
    %1365 = vmatprep.subr.mxu0 %v39
    %1366 = vmatpush1.msra.mxu0 %v38
    %1367 = vmatprep.subr.mxu0 %v37
    %1368 = vmatpush1.msra.mxu0 %v36
    %1369 = vmatprep.subr.mxu0 %v35
    %1370 = vmatpush1.msra.mxu0 %v34
    %1371 = vmatprep.subr.mxu0 0.0
    %1372 = vmatpush2.msra.mxu0 0.0
    %1373 = vmatprep.subr.mxu0 0.0
    %1374 = vmatpush2.msra.mxu0 0.0
    %1375 = vmatprep.subr.mxu0 0.0
    %1376 = vmatpush2.msra.mxu0 0.0
    %1377 = vmatprep.subr.mxu0 0.0
    %1378 = vmatpush2.msra.mxu0 0.0
    %1379 = vmatprep.subr.mxu0 0.0
    %1380 = vmatpush2.msra.mxu0 0.0
    %1381 = vmatprep.subr.mxu0 0.0
    %1382 = vmatpush2.msra.mxu0 0.0
    %1383 = vmatprep.subr.mxu0 0.0
    %1384 = vmatpush2.msra.mxu0 0.0
    %1385 = vmatprep.subr.mxu0 0.0
    %1386 = vmatpush2.msra.mxu0 0.0
    %1387 = vmatprep.subr.mxu0 0.0
    %1388 = vmatpush2.msra.mxu0 0.0
    %1389 = vmatprep.subr.mxu0 0.0
    %1390 = vmatpush2.msra.mxu0 0.0
    %1391 = vmatprep.subr.mxu0 0.0
    %1392 = vmatpush2.msra.mxu0 0.0
    %1393 = vmatprep.subr.mxu0 0.0
    %1394 = vmatpush2.msra.mxu0 0.0
    %1395 = vmatprep.subr.mxu0 0.0
    %1396 = vmatpush2.msra.mxu0 0.0
    %1397 = vmatprep.subr.mxu0 0.0
    %1398 = vmatpush2.msra.mxu0 0.0
    %1399 = vmatprep.subr.mxu0 0.0
    %1400 = vmatpush2.msra.mxu0 0.0
    %1401 = vmatprep.subr.mxu0 0.0
    %1402 = vmatpush2.msra.mxu0 0.0
    %1403 = vmatprep.mubr.f32.mxu0 0.0
    %1404 = vmatmul.mubr.f32.gmra.mxu0 %v1337
    %v1405 = vpop.f32.mrf.mxu0
    %v1406 = vadd.f32 %v1335, %v1405
    %v1407 = vpop.f32.mrf.mxu0
    %v1408 = vadd.f32 %v1336, %v1407
    %1409 = vdwg.mxu0
    %v1410 = vxor.u32 %v1406, 2147483648
    %v1411 = vmul.f32 %v1410, 1.442695
    %v1412 = vpow.pop %v1411
    %v1413 = vadd.f32 %v1412, 1.0
    %v1414 = vrcp.pop %v1413
    %v1415 = vmul.f32 1.0, %v1414
    %v1416 = vtanh.pop %v1406
    %v1417 = vtanh.pop %v1408
    %1418 = vmatprep.subr.mxu0 0.0
    %1419 = vmatpush1.msra.mxu0 0.0
    %1420 = vmatprep.subr.mxu0 0.0
    %1421 = vmatpush1.msra.mxu0 0.0
    %1422 = vmatprep.subr.mxu0 0.0
    %1423 = vmatpush1.msra.mxu0 0.0
    %1424 = vmatprep.subr.mxu0 0.0
    %1425 = vmatpush1.msra.mxu0 0.0
    %1426 = vmatprep.subr.mxu0 0.0
    %1427 = vmatpush1.msra.mxu0 0.0
    %1428 = vmatprep.subr.mxu0 0.0
    %1429 = vmatpush1.msra.mxu0 0.0
    %1430 = vmatprep.subr.mxu0 0.0
    %1431 = vmatpush1.msra.mxu0 0.0
    %1432 = vmatprep.subr.mxu0 0.0
    %1433 = vmatpush1.msra.mxu0 0.0
    %1434 = vmatprep.subr.mxu0 0.0
    %1435 = vmatpush1.msra.mxu0 0.0
    %1436 = vmatprep.subr.mxu0 0.0
    %1437 = vmatpush1.msra.mxu0 0.0
    %1438 = vmatprep.subr.mxu0 0.0
    %1439 = vmatpush1.msra.mxu0 0.0
    %1440 = vmatprep.subr.mxu0 0.0
    %1441 = vmatpush1.msra.mxu0 0.0
    %1442 = vmatprep.subr.mxu0 0.0
    %1443 = vmatpush1.msra.mxu0 0.0
    %1444 = vmatprep.subr.mxu0 0.0
    %1445 = vmatpush1.msra.mxu0 0.0
    %1446 = vmatprep.subr.mxu0 0.0
    %1447 = vmatpush1.msra.mxu0 0.0
    %1448 = vmatprep.subr.mxu0 0.0
    %1449 = vmatpush1.msra.mxu0 %v1417
    %1450 = vmatprep.subr.mxu0 0.0
    %1451 = vmatpush2.msra.mxu0 0.0
    %1452 = vmatprep.subr.mxu0 0.0
    %1453 = vmatpush2.msra.mxu0 0.0
    %1454 = vmatprep.subr.mxu0 0.0
    %1455 = vmatpush2.msra.mxu0 0.0
    %1456 = vmatprep.subr.mxu0 0.0
    %1457 = vmatpush2.msra.mxu0 0.0
    %1458 = vmatprep.subr.mxu0 0.0
    %1459 = vmatpush2.msra.mxu0 0.0
    %1460 = vmatprep.subr.mxu0 0.0
    %1461 = vmatpush2.msra.mxu0 0.0
    %1462 = vmatprep.subr.mxu0 0.0
    %1463 = vmatpush2.msra.mxu0 0.0
    %1464 = vmatprep.subr.mxu0 0.0
    %1465 = vmatpush2.msra.mxu0 0.0
    %1466 = vmatprep.subr.mxu0 0.0
    %1467 = vmatpush2.msra.mxu0 0.0
    %1468 = vmatprep.subr.mxu0 0.0
    %1469 = vmatpush2.msra.mxu0 0.0
    %1470 = vmatprep.subr.mxu0 0.0
    %1471 = vmatpush2.msra.mxu0 0.0
    %1472 = vmatprep.subr.mxu0 0.0
    %1473 = vmatpush2.msra.mxu0 0.0
    %1474 = vmatprep.subr.mxu0 0.0
    %1475 = vmatpush2.msra.mxu0 0.0
    %1476 = vmatprep.subr.mxu0 0.0
    %1477 = vmatpush2.msra.mxu0 0.0
    %1478 = vmatprep.subr.mxu0 0.0
    %1479 = vmatpush2.msra.mxu0 0.0
    %1480 = vmatprep.subr.mxu0 0.0
    %1481 = vmatpush2.msra.mxu0 0.0
    %1482 = vmatprep.mubr.f32.mxu0 0.0
    %1483 = vmatmul.mubr.f32.gmra.mxu0 %v314
    %v1484 = vpop.f32.mrf.mxu0
    %v1485 = vadd.f32 0.0, %v1484
    %v1486 = vpop.f32.mrf.mxu0
    %1487 = vdwg.mxu0
    %1489 = vrot.lane.b32.xlu0 %v1485, 32
    %v1490 = vpop.permute.xlu0 %1489
    %v1492 = vadd.f32 %v1319, %v1490
    %v1493 = vmul.f32 %v1415, %v1492
    %1495 = vrot.lane.b32.xlu0 %v1416, 64
    %v1496 = vpop.permute.xlu0 %1495
    %v1498 = vmul.f32 %v1415, %v1496
    %1500 = vrot.lane.b32.xlu0 %v1498, 32
    %v1501 = vpop.permute.xlu0 %1500
    %v1503 = vadd.f32 %v1493, %v1501
    %v1504 = vtanh.pop %v1503
    %1506 = vrot.lane.b32.xlu0 %v1504, 64
    %v1507 = vpop.permute.xlu0 %1506
    %v1509 = vmul.f32 %v1415, %v1507
    %1511 = vrot.lane.b32.xlu0 %v1509, 32
    %v1512 = vpop.permute.xlu0 %1511
    %s1514 = scalar_lea.vmem [#allocation6], 48
    %1515 = vst.msk [vmem:[%s1514] sm:$0xff] %vm209, %v1512
    %s1516 = smul.u32 7, 2
    %s1517 = smul.addr %s1516, 8
    %s1518 = scalar_lea.vmem [#allocation2], %s1517
    %v1519 = vld [vmem:[%s1518] sm:$0xff]
    %v1520 = vld [vmem:[%s1518 + $0x8] sm:$0xff]
    %v1521 = vsel %vm209, %v1512, 0
    %1523 = vmatprep.subr.mxu0 0.0
    %1524 = vmatpush1.msra.mxu0 0.0
    %1525 = vmatprep.subr.mxu0 0.0
    %1526 = vmatpush1.msra.mxu0 0.0
    %1527 = vmatprep.subr.mxu0 0.0
    %1528 = vmatpush1.msra.mxu0 0.0
    %1529 = vmatprep.subr.mxu0 0.0
    %1530 = vmatpush1.msra.mxu0 0.0
    %1531 = vmatprep.subr.mxu0 0.0
    %1532 = vmatpush1.msra.mxu0 0.0
    %1533 = vmatprep.subr.mxu0 0.0
    %1534 = vmatpush1.msra.mxu0 0.0
    %1535 = vmatprep.subr.mxu0 0.0
    %1536 = vmatpush1.msra.mxu0 0.0
    %1537 = vmatprep.subr.mxu0 0.0
    %1538 = vmatpush1.msra.mxu0 0.0
    %1539 = vmatprep.subr.mxu0 0.0
    %1540 = vmatpush1.msra.mxu0 0.0
    %1541 = vmatprep.subr.mxu0 0.0
    %1542 = vmatpush1.msra.mxu0 0.0
    %1543 = vmatprep.subr.mxu0 0.0
    %1544 = vmatpush1.msra.mxu0 0.0
    %1545 = vmatprep.subr.mxu0 0.0
    %1546 = vmatpush1.msra.mxu0 0.0
    %1547 = vmatprep.subr.mxu0 %v41
    %1548 = vmatpush1.msra.mxu0 %v40
    %1549 = vmatprep.subr.mxu0 %v39
    %1550 = vmatpush1.msra.mxu0 %v38
    %1551 = vmatprep.subr.mxu0 %v37
    %1552 = vmatpush1.msra.mxu0 %v36
    %1553 = vmatprep.subr.mxu0 %v35
    %1554 = vmatpush1.msra.mxu0 %v34
    %1555 = vmatprep.subr.mxu0 0.0
    %1556 = vmatpush2.msra.mxu0 0.0
    %1557 = vmatprep.subr.mxu0 0.0
    %1558 = vmatpush2.msra.mxu0 0.0
    %1559 = vmatprep.subr.mxu0 0.0
    %1560 = vmatpush2.msra.mxu0 0.0
    %1561 = vmatprep.subr.mxu0 0.0
    %1562 = vmatpush2.msra.mxu0 0.0
    %1563 = vmatprep.subr.mxu0 0.0
    %1564 = vmatpush2.msra.mxu0 0.0
    %1565 = vmatprep.subr.mxu0 0.0
    %1566 = vmatpush2.msra.mxu0 0.0
    %1567 = vmatprep.subr.mxu0 0.0
    %1568 = vmatpush2.msra.mxu0 0.0
    %1569 = vmatprep.subr.mxu0 0.0
    %1570 = vmatpush2.msra.mxu0 0.0
    %1571 = vmatprep.subr.mxu0 0.0
    %1572 = vmatpush2.msra.mxu0 0.0
    %1573 = vmatprep.subr.mxu0 0.0
    %1574 = vmatpush2.msra.mxu0 0.0
    %1575 = vmatprep.subr.mxu0 0.0
    %1576 = vmatpush2.msra.mxu0 0.0
    %1577 = vmatprep.subr.mxu0 0.0
    %1578 = vmatpush2.msra.mxu0 0.0
    %1579 = vmatprep.subr.mxu0 0.0
    %1580 = vmatpush2.msra.mxu0 0.0
    %1581 = vmatprep.subr.mxu0 0.0
    %1582 = vmatpush2.msra.mxu0 0.0
    %1583 = vmatprep.subr.mxu0 0.0
    %1584 = vmatpush2.msra.mxu0 0.0
    %1585 = vmatprep.subr.mxu0 0.0
    %1586 = vmatpush2.msra.mxu0 0.0
    %1587 = vmatprep.mubr.f32.mxu0 0.0
    %1588 = vmatmul.mubr.f32.gmra.mxu0 %v1521
    %v1589 = vpop.f32.mrf.mxu0
    %v1590 = vadd.f32 %v1519, %v1589
    %v1591 = vpop.f32.mrf.mxu0
    %v1592 = vadd.f32 %v1520, %v1591
    %1593 = vdwg.mxu0
    %v1594 = vxor.u32 %v1590, 2147483648
    %v1595 = vmul.f32 %v1594, 1.442695
    %v1596 = vpow.pop %v1595
    %v1597 = vadd.f32 %v1596, 1.0
    %v1598 = vrcp.pop %v1597
    %v1599 = vmul.f32 1.0, %v1598
    %v1600 = vtanh.pop %v1590
    %v1601 = vtanh.pop %v1592
    %1602 = vmatprep.subr.mxu0 0.0
    %1603 = vmatpush1.msra.mxu0 0.0
    %1604 = vmatprep.subr.mxu0 0.0
    %1605 = vmatpush1.msra.mxu0 0.0
    %1606 = vmatprep.subr.mxu0 0.0
    %1607 = vmatpush1.msra.mxu0 0.0
    %1608 = vmatprep.subr.mxu0 0.0
    %1609 = vmatpush1.msra.mxu0 0.0
    %1610 = vmatprep.subr.mxu0 0.0
    %1611 = vmatpush1.msra.mxu0 0.0
    %1612 = vmatprep.subr.mxu0 0.0
    %1613 = vmatpush1.msra.mxu0 0.0
    %1614 = vmatprep.subr.mxu0 0.0
    %1615 = vmatpush1.msra.mxu0 0.0
    %1616 = vmatprep.subr.mxu0 0.0
    %1617 = vmatpush1.msra.mxu0 0.0
    %1618 = vmatprep.subr.mxu0 0.0
    %1619 = vmatpush1.msra.mxu0 0.0
    %1620 = vmatprep.subr.mxu0 0.0
    %1621 = vmatpush1.msra.mxu0 0.0
    %1622 = vmatprep.subr.mxu0 0.0
    %1623 = vmatpush1.msra.mxu0 0.0
    %1624 = vmatprep.subr.mxu0 0.0
    %1625 = vmatpush1.msra.mxu0 0.0
    %1626 = vmatprep.subr.mxu0 0.0
    %1627 = vmatpush1.msra.mxu0 0.0
    %1628 = vmatprep.subr.mxu0 0.0
    %1629 = vmatpush1.msra.mxu0 0.0
    %1630 = vmatprep.subr.mxu0 0.0
    %1631 = vmatpush1.msra.mxu0 0.0
    %1632 = vmatprep.subr.mxu0 0.0
    %1633 = vmatpush1.msra.mxu0 %v1601
    %1634 = vmatprep.subr.mxu0 0.0
    %1635 = vmatpush2.msra.mxu0 0.0
    %1636 = vmatprep.subr.mxu0 0.0
    %1637 = vmatpush2.msra.mxu0 0.0
    %1638 = vmatprep.subr.mxu0 0.0
    %1639 = vmatpush2.msra.mxu0 0.0
    %1640 = vmatprep.subr.mxu0 0.0
    %1641 = vmatpush2.msra.mxu0 0.0
    %1642 = vmatprep.subr.mxu0 0.0
    %1643 = vmatpush2.msra.mxu0 0.0
    %1644 = vmatprep.subr.mxu0 0.0
    %1645 = vmatpush2.msra.mxu0 0.0
    %1646 = vmatprep.subr.mxu0 0.0
    %1647 = vmatpush2.msra.mxu0 0.0
    %1648 = vmatprep.subr.mxu0 0.0
    %1649 = vmatpush2.msra.mxu0 0.0
    %1650 = vmatprep.subr.mxu0 0.0
    %1651 = vmatpush2.msra.mxu0 0.0
    %1652 = vmatprep.subr.mxu0 0.0
    %1653 = vmatpush2.msra.mxu0 0.0
    %1654 = vmatprep.subr.mxu0 0.0
    %1655 = vmatpush2.msra.mxu0 0.0
    %1656 = vmatprep.subr.mxu0 0.0
    %1657 = vmatpush2.msra.mxu0 0.0
    %1658 = vmatprep.subr.mxu0 0.0
    %1659 = vmatpush2.msra.mxu0 0.0
    %1660 = vmatprep.subr.mxu0 0.0
    %1661 = vmatpush2.msra.mxu0 0.0
    %1662 = vmatprep.subr.mxu0 0.0
    %1663 = vmatpush2.msra.mxu0 0.0
    %1664 = vmatprep.subr.mxu0 0.0
    %1665 = vmatpush2.msra.mxu0 0.0
    %1666 = vmatprep.mubr.f32.mxu0 0.0
    %1667 = vmatmul.mubr.f32.gmra.mxu0 %v314
    %v1668 = vpop.f32.mrf.mxu0
    %v1669 = vadd.f32 0.0, %v1668
    %v1670 = vpop.f32.mrf.mxu0
    %1671 = vdwg.mxu0
    %1673 = vrot.lane.b32.xlu0 %v1669, 32
    %v1674 = vpop.permute.xlu0 %1673
    %v1676 = vadd.f32 %v1503, %v1674
    %v1677 = vmul.f32 %v1599, %v1676
    %1679 = vrot.lane.b32.xlu0 %v1600, 64
    %v1680 = vpop.permute.xlu0 %1679
    %v1682 = vmul.f32 %v1599, %v1680
    %1684 = vrot.lane.b32.xlu0 %v1682, 32
    %v1685 = vpop.permute.xlu0 %1684
    %v1687 = vadd.f32 %v1677, %v1685
    %v1688 = vtanh.pop %v1687
    %1690 = vrot.lane.b32.xlu0 %v1688, 64
    %v1691 = vpop.permute.xlu0 %1690
    %v1693 = vmul.f32 %v1599, %v1691
    %1695 = vrot.lane.b32.xlu0 %v1693, 32
    %v1696 = vpop.permute.xlu0 %1695
    %s1698 = scalar_lea.vmem [#allocation6], 56
    %1699 = vst.msk [vmem:[%s1698] sm:$0xff] %vm209, %v1696
    // Predicated region
    $region26: #{tpu_custom_call.1} parent=1 // pred_check
      _
    $region27: #{tpu_custom_call.1} parent=1 // pred_check_branch
      %1701 = sbr.rel (0) target = $region29
    $region28: #{tpu_custom_call.1} parent=1 // pred_region
      %s1703 = ssub.s32 1024, 1024
      %1704 = vsyncadd [#allocation5], %s1703
      %s1705 = sshll.u32 [#allocation6], 4
      %s1706 = int_to_ptr.vmem [resolvable:$true] %s1705
      %1711 = dma.vmem_to_hbm [thread:$0]  %s1706, 1024, %s5, [#allocation5], 128, 128, 8
    $region29: #{tpu_custom_call.1} parent=1 // pred_fallthru
      _
    // Predicated region
    $region30: #{tpu_custom_call.1} parent=1 // pred_check
      _
    $region31: #{tpu_custom_call.1} parent=1 // pred_check_branch
      %1713 = sbr.rel (0) target = $region33
    $region32: #{tpu_custom_call.1} parent=1 // pred_region
      %1714 = dma.done [#allocation5], 1024
    $region33: #{tpu_custom_call.1} parent=1 // pred_fallthru
      _
    %1715 = vsyncpa [#allocation4], 1
    %1716 = vsyncpa [#allocation5], 1

</llo_original>
